<compile_context>
chip_gen: v6e
topology: v6e:2x2x1
jax: 0.10.0
libtpu: 0.0.40
codegen_flags: <defaults>
</compile_context>

<pallas_src>
import jax
import jax.numpy as jnp
import numpy as np
from jax import lax
from jax.experimental import pallas as pl
from jax.experimental.pallas import tpu as pltpu

_TOP_PAD = 8      # zero rows above the pooled map -> 8-aligned scratch stores
_MAX_TH = 1024    # caps the (Th/4, Th) row selector at <= 4 MiB


def _physical_vmem_bytes():
    """Best-effort physical VMEM query; conservative (v7x-sized) fallback."""
    try:
        info = pltpu.get_tpu_info()
        for name in ("vmem_capacity_bytes", "vmem_bytes", "vmem_size_bytes"):
            v = getattr(info, name, None)
            if v:
                return int(v)
    except Exception:
        pass
    return 64 * 1024 * 1024


def _choose_tiling(n, c, h, w, itemsize, budget):
    """Pick (Nb images per grid step, Th rows per grid step)."""
    row_bytes = c * w * itemsize             # one full-width, all-channel row
    image_bytes = row_bytes * h
    if image_bytes <= budget and h <= _MAX_TH:
        # Whole image fits: batch images per step to amortize the ~0.35us
        # per-step overhead, but keep >= 2 steps on the parallel N axis so a
        # v7x megacore can split images across both TensorCores.
        max_nb = max(1, int(budget // image_bytes))
        cap = max(1, min(n, 16, max_nb, max(1, n // 2)))
        nb = 1
        for cand in range(cap, 0, -1):
            if n % cand == 0:
                nb = cand
                break
        return nb, h
    if h <= 32:
        return 1, h                           # single (possibly large) tile
    # Tile H.  Th % 32 == 0 so the Th/4 pooled rows stay sublane (8) aligned.
    limit = min(h, _MAX_TH, max(32, int(budget // row_bytes)))
    limit = max(32, (limit // 32) * 32)
    best = 0
    for t in range(32, limit + 1, 32):        # prefer exact divisors of H
        if h % t == 0:
            best = t
    if best:
        return 1, best
    return 1, limit                           # ragged last tile (masked)


def l_spa5(org, enhance, *, block_budget_bytes=None, vmem_limit_bytes=None):
    """Pallas TPU implementation of L_spa5.forward.

    org:     (N, C, H, W) (or (N, 1, C, H, W), mirroring torch.squeeze(dim=1))
    enhance: (N, C, H, W)
    returns: (N, 1, H//4 - 2, W//4 - 2)
    """
    if org.ndim == 5 and org.shape[1] == 1:   # torch.squeeze(org, dim=1)
        org = org[:, 0]
    n, c, h, w = org.shape
    assert enhance.shape == (n, c, h, w), (org.shape, enhance.shape)

    # AvgPool2d(4) floors the output size -> crop any trailing remainder.
    if h % 4 or w % 4:
        h, w = (h // 4) * 4, (w // 4) * 4
        org, enhance = org[:, :, :h, :w], enhance[:, :, :h, :w]
    hp, wp = h // 4, w // 4
    assert hp >= 3 and wp >= 3, "pooled feature map too small for the 5x5 stencils"
    ho, wo = hp - 2, wp - 2

    itemsize = jnp.dtype(org.dtype).itemsize

    # Generation-aware VMEM plan (feedback #1).
    phys_vmem = _physical_vmem_bytes()
    if phys_vmem >= 128 * 1024 * 1024:            # v5e / v6e
        budget, base_limit = 8 * 1024 * 1024, 64 * 1024 * 1024
    else:                                         # v7x (64 MiB physical VMEM)
        budget, base_limit = 4 * 1024 * 1024, 40 * 1024 * 1024
    if block_budget_bytes is not None:
        budget = int(block_budget_bytes)
    vmem_cap = max(24 * 1024 * 1024, int(phys_vmem * 0.85))

    # Pick the tiling; shrink the budget if the steady-state footprint
    # (org + enh, each double-buffered, + selectors + scratch) will not fit.
    while True:
        nb, th = _choose_tiling(n, c, h, w, itemsize, budget)
        tr = th // 4
        n_ht = int(pl.cdiv(h, th))
        d_rows = _TOP_PAD + n_ht * tr + 1
        block_bytes = nb * c * th * w * itemsize
        est = (4 * block_bytes                        # org+enh, double-buffered
               + 2 * (tr * th + w * (wp + 2)) * 4     # resident 0/1 selectors
               + nb * d_rows * (wp + 2) * 4           # pooled-diff scratch
               + 2 * nb * ho * wo * itemsize          # output blocks
               + block_bytes                          # in-kernel f32 temporaries
               + (2 << 20))                           # slack
        if est <= vmem_cap or budget <= (1 << 20):
            break
        budget //= 2
    vmem_limit = int(min(vmem_cap, max(base_limit, est)))
    if vmem_limit_bytes is not None:
        vmem_limit = int(vmem_limit_bytes)

    ragged = (h % th) != 0
    assert tr % 8 == 0 or n_ht == 1, (tr, n_ht)       # aligned scratch stores
    out_scale = 1.0 / float(16 * c) ** 2              # undoes the unscaled sums

    # 0/1 pooling selectors, built once in XLA and resident in VMEM for the
    # whole grid.  col_sel has an all-zero first and last column so pooled rows
    # land in the scratch already zero-padded along W (the conv padding=1).
    row_sel = (jnp.arange(tr, dtype=jnp.int32)[:, None]
               == jnp.arange(th, dtype=jnp.int32)[None, :] // 4
               ).astype(jnp.float32)
    col_sel = (jnp.arange(w, dtype=jnp.int32)[:, None] // 4
               == jnp.arange(wp + 2, dtype=jnp.int32)[None, :] - 1
               ).astype(jnp.float32)

    def kernel(org_ref, enh_ref, row_sel_ref, col_sel_ref, e_ref, d_ref):
        ht = pl.program_id(1)
        nb_, c_, th_, w_ = org_ref.shape
        tr_ = row_sel_ref.shape[0]

        # Fresh zero-padded scratch at the start of every batch block; the
        # zero border reproduces the padding=1 of the reference convolutions.
        @pl.when(ht == 0)
        def _():
            d_ref[...] = jnp.zeros_like(d_ref)

        # Channel sum of (org - enhance), exact f32 adds, vectorized over Nb.
        msum = (org_ref[:, 0, :, :].astype(jnp.float32)
                - enh_ref[:, 0, :, :].astype(jnp.float32))
        for ci in range(1, c_):
            msum = msum + (org_ref[:, ci, :, :].astype(jnp.float32)
                           - enh_ref[:, ci, :, :].astype(jnp.float32))

        if ragged:  # zero the (unspecified) rows of the clamped last H block
            rid = ht * th_ + lax.broadcasted_iota(jnp.int32, (th_, 1), 0)
            msum = jnp.where((rid < h)[None, :, :], msum, 0.0)

        row_sel_v = row_sel_ref[...]            # (tr, Th)   0/1
        col_sel_v = col_sel_ref[...]            # (W, wp+2)  0/1, zero border
        if tr_ % 8 == 0:
            row0 = pl.multiple_of(_TOP_PAD + ht * tr_, 8)
        else:
            row0 = _TOP_PAD                     # only when the grid has 1 H tile

        # 4x4 average pooling (unnormalized sums) as two selector matmuls on
        # the MXU.  HIGHEST keeps full f32 accuracy; the extra passes remain
        # hidden under the HBM-bound stream on all generations.
        for b in range(nb_):                    # Nb is small; images are tiny
            rowsum = jnp.dot(row_sel_v, msum[b],
                             precision=lax.Precision.HIGHEST,
                             preferred_element_type=jnp.float32)   # (tr, W)
            pooled = jnp.dot(rowsum, col_sel_v,
                             precision=lax.Precision.HIGHEST,
                             preferred_element_type=jnp.float32)   # (tr, wp+2)
            d_ref[b, pl.ds(row0, tr_), :] = pooled

        # Last H tile: padded pooled difference complete -> 4-direction
        # stencil + square-sum, rescaled by (1/(16*C))^2.
        @pl.when(ht == pl.num_programs(1) - 1)
        def _():
            base = _TOP_PAD - 1                 # row of the top conv-padding
            for b in range(nb_):
                def win(r, s):
                    return d_ref[b, pl.ds(base + r, ho), pl.ds(s, wo)]

                center = win(2, 2)
                d_l = 2.0 * center - win(2, 1) - win(2, 0)
                d_r = 2.0 * center - win(2, 3) - win(2, 4)
                d_u = 2.0 * center - win(1, 2) - win(0, 2)
                d_d = 2.0 * center - win(3, 2) - win(4, 2)
                e_blk = (d_l * d_l + d_r * d_r + d_u * d_u + d_d * d_d)
                e_ref[b] = (e_blk * out_scale).astype(e_ref.dtype)

    img_spec = pl.BlockSpec((nb, c, th, w), lambda i, j: (i, 0, j, 0))

    e = pl.pallas_call(
        kernel,
        out_shape=jax.ShapeDtypeStruct((n, ho, wo), org.dtype),
        grid_spec=pltpu.PrefetchScalarGridSpec(
            num_scalar_prefetch=0,
            grid=(n // nb, n_ht),
            in_specs=[
                img_spec,
                img_spec,
                pl.BlockSpec((tr, th), lambda i, j: (0, 0)),
                pl.BlockSpec((w, wp + 2), lambda i, j: (0, 0)),
            ],
            out_specs=pl.BlockSpec((nb, ho, wo), lambda i, j: (i, 0, 0)),
            scratch_shapes=[pltpu.VMEM((nb, d_rows, wp + 2), jnp.float32)],
        ),
        compiler_params=pltpu.CompilerParams(
            dimension_semantics=("parallel", "arbitrary"),
            vmem_limit_bytes=vmem_limit,
        ),
    )(org, enhance, row_sel, col_sel)

    return e.reshape(n, 1, ho, wo)


def _reference(org, enhance):
    """Pure-JAX mirror of the PyTorch L_spa5.forward."""
    if org.ndim == 5 and org.shape[1] == 1:
        org = org[:, 0]
    org_mean = jnp.mean(org.astype(jnp.float32), axis=1, keepdims=True)
    enh_mean = jnp.mean(enhance.astype(jnp.float32), axis=1, keepdims=True)

    def pool4(x):
        b_, _, hh, ww = x.shape
        x = x[:, :, :(hh // 4) * 4, :(ww // 4) * 4]
        x = x.reshape(b_, 1, hh // 4, 4, ww // 4, 4)
        return x.mean(axis=(3, 5))

    org_pool = pool4(org_mean)
    enh_pool = pool4(enh_mean)

    A = jnp.array([[0, 0, 0, 0, 0],
                   [0, 0, 0, 0, 0],
                   [-1, -1, 2, 0, 0],
                   [0, 0, 0, 0, 0],
                   [0, 0, 0, 0, 0]], jnp.float32)
    kernels = [A, jnp.rot90(A, 2), jnp.rot90(A, -1), jnp.rot90(A, 1)]

    def conv(x, k):
        return lax.conv_general_dilated(
            x, k[None, None], window_strides=(1, 1), padding=((1, 1), (1, 1)),
            dimension_numbers=("NCHW", "OIHW", "NCHW"),
            precision=lax.Precision.HIGHEST)

    e = 0.0
    for k in kernels:
        d = conv(org_pool, k) - conv(enh_pool, k)
        e = e + d * d
    return e


if __name__ == "__main__":
    key = jax.random.PRNGKey(0)

    # Test 1: small batch, whole-image tiles, 2 parallel grid steps.
    k1, k2 = jax.random.split(key)
    N, C, H, W = 2, 4, 16, 16
    org = jax.random.uniform(k1, (N, C, H, W), dtype=jnp.float32)
    enhance = jax.random.uniform(k2, (N, C, H, W), dtype=jnp.float32)
    e = l_spa5(org, enhance)
    jax.block_until_ready(e)
    e_ref = _reference(org, enhance)
    assert e.shape == (N, 1, H // 4 - 2, W // 4 - 2), e.shape
    np.testing.assert_allclose(np.asarray(e), np.asarray(e_ref),
                               rtol=1e-4, atol=1e-6)

    # Test 2: force the H-tiled path with a ragged (masked) last tile by
    # shrinking the block budget (exercises the multi-tile accumulation,
    # aligned scratch stores, and out-of-bounds row masking).
    k3, k4 = jax.random.split(k2)
    N2, C2, H2, W2 = 1, 3, 112, 64
    org2 = jax.random.uniform(k3, (N2, C2, H2, W2), dtype=jnp.float32)
    enh2 = jax.random.uniform(k4, (N2, C2, H2, W2), dtype=jnp.float32)
    e2 = l_spa5(org2, enh2, block_budget_bytes=32 * 1024)
    jax.block_until_ready(e2)
    e2_ref = _reference(org2, enh2)
    assert e2.shape == (N2, 1, H2 // 4 - 2, W2 // 4 - 2), e2.shape
    np.testing.assert_allclose(np.asarray(e2), np.asarray(e2_ref),
                               rtol=1e-4, atol=1e-6)

    print("KERNEL_OK")
</pallas_src>

<mosaic_0001>
module attributes {stable_mosaic.version = 11 : i64} {
  func.func @kernel(%arg0: i32, %arg1: i32, %arg2: memref<1x4x16x16xf32, #tpu.memory_space<vmem>>, %arg3: memref<1x4x16x16xf32, #tpu.memory_space<vmem>>, %arg4: memref<4x16xf32, #tpu.memory_space<vmem>>, %arg5: memref<16x6xf32, #tpu.memory_space<vmem>>, %arg6: memref<1x2x2xf32, #tpu.memory_space<vmem>>, %arg7: memref<1x13x6xf32, #tpu.memory_space<vmem>>) attributes {dimension_semantics = [#tpu.dimension_semantics<parallel>, #tpu.dimension_semantics<arbitrary>], iteration_bounds = array<i64: 2, 1>, scalar_prefetch = 0 : i64, scratch_operands = 1 : i64, tpu.core_type = #tpu.core_type<tc>, window_params = [{transform_indices = @transform_0, window_bounds = array<i64: 1, 4, 16, 16>}, {transform_indices = @transform_1, window_bounds = array<i64: 1, 4, 16, 16>}, {pipeline_mode = #tpu.pipeline_mode<synchronous>, transform_indices = @transform_2, window_bounds = array<i64: 4, 16>}, {pipeline_mode = #tpu.pipeline_mode<synchronous>, transform_indices = @transform_3, window_bounds = array<i64: 16, 6>}, {transform_indices = @transform_4, window_bounds = array<i64: 1, 2, 2>}]} {
    %c0_i32 = arith.constant 0 : i32
    %0 = arith.cmpi eq, %arg1, %c0_i32 : i32
    %1 = arith.extui %0 : i1 to i32
    %c0_i32_0 = arith.constant 0 : i32
    %2 = arith.cmpi ne, %1, %c0_i32_0 : i32
    scf.if %2 {
      %cst_38 = arith.constant 0.000000e+00 : f32
      %37 = vector.broadcast %cst_38 : f32 to vector<1x13x6xf32>
      %c0_39 = arith.constant 0 : index
      %c0_40 = arith.constant 0 : index
      %c0_41 = arith.constant 0 : index
      %38 = vector.load %arg7[%c0_39, %c0_40, %c0_41] : memref<1x13x6xf32, #tpu.memory_space<vmem>>, vector<1x13x6xf32>
      tpu.vector_store %arg7[%c0_39, %c0_40, %c0_41], %37 {strides = array<i32>} : memref<1x13x6xf32, #tpu.memory_space<vmem>>, vector<1x13x6xf32>,
    } else {
    }
    %c0 = arith.constant 0 : index
    %c0_1 = arith.constant 0 : index
    %c0_2 = arith.constant 0 : index
    %c0_3 = arith.constant 0 : index
    %3 = vector.load %arg2[%c0, %c0_1, %c0_2, %c0_3] : memref<1x4x16x16xf32, #tpu.memory_space<vmem>>, vector<1x1x16x16xf32>
    %4 = vector.shape_cast %3 : vector<1x1x16x16xf32> to vector<1x16x16xf32>
    %c0_4 = arith.constant 0 : index
    %c0_5 = arith.constant 0 : index
    %c0_6 = arith.constant 0 : index
    %c0_7 = arith.constant 0 : index
    %5 = vector.load %arg3[%c0_4, %c0_5, %c0_6, %c0_7] : memref<1x4x16x16xf32, #tpu.memory_space<vmem>>, vector<1x1x16x16xf32>
    %6 = vector.shape_cast %5 : vector<1x1x16x16xf32> to vector<1x16x16xf32>
    %7 = arith.subf %4, %6 : vector<1x16x16xf32>
    %c0_8 = arith.constant 0 : index
    %c1 = arith.constant 1 : index
    %c0_9 = arith.constant 0 : index
    %c0_10 = arith.constant 0 : index
    %8 = vector.load %arg2[%c0_8, %c1, %c0_9, %c0_10] : memref<1x4x16x16xf32, #tpu.memory_space<vmem>>, vector<1x1x16x16xf32>
    %9 = vector.shape_cast %8 : vector<1x1x16x16xf32> to vector<1x16x16xf32>
    %c0_11 = arith.constant 0 : index
    %c1_12 = arith.constant 1 : index
    %c0_13 = arith.constant 0 : index
    %c0_14 = arith.constant 0 : index
    %10 = vector.load %arg3[%c0_11, %c1_12, %c0_13, %c0_14] : memref<1x4x16x16xf32, #tpu.memory_space<vmem>>, vector<1x1x16x16xf32>
    %11 = vector.shape_cast %10 : vector<1x1x16x16xf32> to vector<1x16x16xf32>
    %12 = arith.subf %9, %11 : vector<1x16x16xf32>
    %13 = arith.addf %7, %12 : vector<1x16x16xf32>
    %c0_15 = arith.constant 0 : index
    %c2 = arith.constant 2 : index
    %c0_16 = arith.constant 0 : index
    %c0_17 = arith.constant 0 : index
    %14 = vector.load %arg2[%c0_15, %c2, %c0_16, %c0_17] : memref<1x4x16x16xf32, #tpu.memory_space<vmem>>, vector<1x1x16x16xf32>
    %15 = vector.shape_cast %14 : vector<1x1x16x16xf32> to vector<1x16x16xf32>
    %c0_18 = arith.constant 0 : index
    %c2_19 = arith.constant 2 : index
    %c0_20 = arith.constant 0 : index
    %c0_21 = arith.constant 0 : index
    %16 = vector.load %arg3[%c0_18, %c2_19, %c0_20, %c0_21] : memref<1x4x16x16xf32, #tpu.memory_space<vmem>>, vector<1x1x16x16xf32>
    %17 = vector.shape_cast %16 : vector<1x1x16x16xf32> to vector<1x16x16xf32>
    %18 = arith.subf %15, %17 : vector<1x16x16xf32>
    %19 = arith.addf %13, %18 : vector<1x16x16xf32>
    %c0_22 = arith.constant 0 : index
    %c3 = arith.constant 3 : index
    %c0_23 = arith.constant 0 : index
    %c0_24 = arith.constant 0 : index
    %20 = vector.load %arg2[%c0_22, %c3, %c0_23, %c0_24] : memref<1x4x16x16xf32, #tpu.memory_space<vmem>>, vector<1x1x16x16xf32>
    %21 = vector.shape_cast %20 : vector<1x1x16x16xf32> to vector<1x16x16xf32>
    %c0_25 = arith.constant 0 : index
    %c3_26 = arith.constant 3 : index
    %c0_27 = arith.constant 0 : index
    %c0_28 = arith.constant 0 : index
    %22 = vector.load %arg3[%c0_25, %c3_26, %c0_27, %c0_28] : memref<1x4x16x16xf32, #tpu.memory_space<vmem>>, vector<1x1x16x16xf32>
    %23 = vector.shape_cast %22 : vector<1x1x16x16xf32> to vector<1x16x16xf32>
    %24 = arith.subf %21, %23 : vector<1x16x16xf32>
    %25 = arith.addf %19, %24 : vector<1x16x16xf32>
    %c0_29 = arith.constant 0 : index
    %c0_30 = arith.constant 0 : index
    %26 = vector.load %arg4[%c0_29, %c0_30] : memref<4x16xf32, #tpu.memory_space<vmem>>, vector<4x16xf32>
    %c0_31 = arith.constant 0 : index
    %c0_32 = arith.constant 0 : index
    %27 = vector.load %arg5[%c0_31, %c0_32] : memref<16x6xf32, #tpu.memory_space<vmem>>, vector<16x6xf32>
    %28 = vector.shape_cast %25 : vector<1x16x16xf32> to vector<16x16xf32>
    %cst = arith.constant dense<0.000000e+00> : vector<4x16xf32>
    %29 = tpu.matmul %26, %28, %cst {dimension_numbers = #tpu.dot_dimension_numbers<[1], [0], [0], [1], [0, 0, 1, 1], [], []>, precision = #tpu.contract_precision<fp32>} : vector<4x16xf32>, vector<16x16xf32>, vector<4x16xf32> -> vector<4x16xf32>
    %cst_33 = arith.constant dense<0.000000e+00> : vector<4x6xf32>
    %30 = tpu.matmul %29, %27, %cst_33 {dimension_numbers = #tpu.dot_dimension_numbers<[1], [0], [0], [1], [0, 0, 1, 1], [], []>, precision = #tpu.contract_precision<fp32>} : vector<4x16xf32>, vector<16x6xf32>, vector<4x6xf32> -> vector<4x6xf32>
    %c0_34 = arith.constant 0 : index
    %c8 = arith.constant 8 : index
    %c0_35 = arith.constant 0 : index
    %31 = vector.load %arg7[%c0_34, %c8, %c0_35] : memref<1x13x6xf32, #tpu.memory_space<vmem>>, vector<1x4x6xf32>
    %32 = vector.shape_cast %31 : vector<1x4x6xf32> to vector<4x6xf32>
    %33 = vector.shape_cast %30 : vector<4x6xf32> to vector<1x4x6xf32>
    tpu.vector_store %arg7[%c0_34, %c8, %c0_35], %33 {strides = array<i32>} : memref<1x13x6xf32, #tpu.memory_space<vmem>>, vector<1x4x6xf32>,
    %c0_i32_36 = arith.constant 0 : i32
    %34 = arith.cmpi eq, %arg1, %c0_i32_36 : i32
    %35 = arith.extui %34 : i1 to i32
    %c0_i32_37 = arith.constant 0 : i32
    %36 = arith.cmpi ne, %35, %c0_i32_37 : i32
    scf.if %36 {
      %c0_38 = arith.constant 0 : index
      %c9 = arith.constant 9 : index
      %c2_39 = arith.constant 2 : index
      %37 = vector.load %arg7[%c0_38, %c9, %c2_39] : memref<1x13x6xf32, #tpu.memory_space<vmem>>, vector<1x2x2xf32>
      %38 = vector.shape_cast %37 : vector<1x2x2xf32> to vector<2x2xf32>
      %cst_40 = arith.constant 2.000000e+00 : f32
      %39 = vector.broadcast %cst_40 : f32 to vector<2x2xf32>
      %40 = arith.mulf %39, %38 : vector<2x2xf32>
      %c0_41 = arith.constant 0 : index
      %c9_42 = arith.constant 9 : index
      %c1_43 = arith.constant 1 : index
      %41 = vector.load %arg7[%c0_41, %c9_42, %c1_43] : memref<1x13x6xf32, #tpu.memory_space<vmem>>, vector<1x2x2xf32>
      %42 = vector.shape_cast %41 : vector<1x2x2xf32> to vector<2x2xf32>
      %43 = arith.subf %40, %42 : vector<2x2xf32>
      %c0_44 = arith.constant 0 : index
      %c9_45 = arith.constant 9 : index
      %c0_46 = arith.constant 0 : index
      %44 = vector.load %arg7[%c0_44, %c9_45, %c0_46] : memref<1x13x6xf32, #tpu.memory_space<vmem>>, vector<1x2x2xf32>
      %45 = vector.shape_cast %44 : vector<1x2x2xf32> to vector<2x2xf32>
      %46 = arith.subf %43, %45 : vector<2x2xf32>
      %cst_47 = arith.constant 2.000000e+00 : f32
      %47 = vector.broadcast %cst_47 : f32 to vector<2x2xf32>
      %48 = arith.mulf %47, %38 : vector<2x2xf32>
      %c0_48 = arith.constant 0 : index
      %c9_49 = arith.constant 9 : index
      %c3_50 = arith.constant 3 : index
      %49 = vector.load %arg7[%c0_48, %c9_49, %c3_50] : memref<1x13x6xf32, #tpu.memory_space<vmem>>, vector<1x2x2xf32>
      %50 = vector.shape_cast %49 : vector<1x2x2xf32> to vector<2x2xf32>
      %51 = arith.subf %48, %50 : vector<2x2xf32>
      %c0_51 = arith.constant 0 : index
      %c9_52 = arith.constant 9 : index
      %c4 = arith.constant 4 : index
      %52 = vector.load %arg7[%c0_51, %c9_52, %c4] : memref<1x13x6xf32, #tpu.memory_space<vmem>>, vector<1x2x2xf32>
      %53 = vector.shape_cast %52 : vector<1x2x2xf32> to vector<2x2xf32>
      %54 = arith.subf %51, %53 : vector<2x2xf32>
      %cst_53 = arith.constant 2.000000e+00 : f32
      %55 = vector.broadcast %cst_53 : f32 to vector<2x2xf32>
      %56 = arith.mulf %55, %38 : vector<2x2xf32>
      %c0_54 = arith.constant 0 : index
      %c8_55 = arith.constant 8 : index
      %c2_56 = arith.constant 2 : index
      %57 = vector.load %arg7[%c0_54, %c8_55, %c2_56] : memref<1x13x6xf32, #tpu.memory_space<vmem>>, vector<1x2x2xf32>
      %58 = vector.shape_cast %57 : vector<1x2x2xf32> to vector<2x2xf32>
      %59 = arith.subf %56, %58 : vector<2x2xf32>
      %c0_57 = arith.constant 0 : index
      %c7 = arith.constant 7 : index
      %c2_58 = arith.constant 2 : index
      %60 = vector.load %arg7[%c0_57, %c7, %c2_58] : memref<1x13x6xf32, #tpu.memory_space<vmem>>, vector<1x2x2xf32>
      %61 = vector.shape_cast %60 : vector<1x2x2xf32> to vector<2x2xf32>
      %62 = arith.subf %59, %61 : vector<2x2xf32>
      %cst_59 = arith.constant 2.000000e+00 : f32
      %63 = vector.broadcast %cst_59 : f32 to vector<2x2xf32>
      %64 = arith.mulf %63, %38 : vector<2x2xf32>
      %c0_60 = arith.constant 0 : index
      %c10 = arith.constant 10 : index
      %c2_61 = arith.constant 2 : index
      %65 = vector.load %arg7[%c0_60, %c10, %c2_61] : memref<1x13x6xf32, #tpu.memory_space<vmem>>, vector<1x2x2xf32>
      %66 = vector.shape_cast %65 : vector<1x2x2xf32> to vector<2x2xf32>
      %67 = arith.subf %64, %66 : vector<2x2xf32>
      %c0_62 = arith.constant 0 : index
      %c11 = arith.constant 11 : index
      %c2_63 = arith.constant 2 : index
      %68 = vector.load %arg7[%c0_62, %c11, %c2_63] : memref<1x13x6xf32, #tpu.memory_space<vmem>>, vector<1x2x2xf32>
      %69 = vector.shape_cast %68 : vector<1x2x2xf32> to vector<2x2xf32>
      %70 = arith.subf %67, %69 : vector<2x2xf32>
      %71 = arith.mulf %46, %46 : vector<2x2xf32>
      %72 = arith.mulf %54, %54 : vector<2x2xf32>
      %73 = arith.addf %71, %72 : vector<2x2xf32>
      %74 = arith.mulf %62, %62 : vector<2x2xf32>
      %75 = arith.addf %73, %74 : vector<2x2xf32>
      %76 = arith.mulf %70, %70 : vector<2x2xf32>
      %77 = arith.addf %75, %76 : vector<2x2xf32>
      %cst_64 = arith.constant 2.44140625E-4 : f32
      %78 = vector.broadcast %cst_64 : f32 to vector<2x2xf32>
      %79 = arith.mulf %77, %78 : vector<2x2xf32>
      %c0_65 = arith.constant 0 : index
      %c0_66 = arith.constant 0 : index
      %c0_67 = arith.constant 0 : index
      %80 = vector.load %arg6[%c0_65, %c0_66, %c0_67] : memref<1x2x2xf32, #tpu.memory_space<vmem>>, vector<1x2x2xf32>
      %81 = vector.shape_cast %80 : vector<1x2x2xf32> to vector<2x2xf32>
      %82 = vector.shape_cast %79 : vector<2x2xf32> to vector<1x2x2xf32>
      tpu.vector_store %arg6[%c0_65, %c0_66, %c0_67], %82 {strides = array<i32>} : memref<1x2x2xf32, #tpu.memory_space<vmem>>, vector<1x2x2xf32>,
    } else {
    }
    return
  }
  func.func @transform_0(%arg0: i32, %arg1: i32) -> (i32, i32, i32, i32) {
    %c0_i32 = arith.constant 0 : i32
    %c0_i32_0 = arith.constant 0 : i32
    %c0_i32_1 = arith.constant 0 : i32
    return %arg0, %c0_i32, %arg1, %c0_i32_0 : i32, i32, i32, i32
  }
  func.func @transform_1(%arg0: i32, %arg1: i32) -> (i32, i32, i32, i32) {
    %c0_i32 = arith.constant 0 : i32
    %c0_i32_0 = arith.constant 0 : i32
    %c0_i32_1 = arith.constant 0 : i32
    return %arg0, %c0_i32, %arg1, %c0_i32_0 : i32, i32, i32, i32
  }
  func.func @transform_2(%arg0: i32, %arg1: i32) -> (i32, i32) {
    %c0_i32 = arith.constant 0 : i32
    %c0_i32_0 = arith.constant 0 : i32
    %c0_i32_1 = arith.constant 0 : i32
    return %c0_i32, %c0_i32_0 : i32, i32
  }
  func.func @transform_3(%arg0: i32, %arg1: i32) -> (i32, i32) {
    %c0_i32 = arith.constant 0 : i32
    %c0_i32_0 = arith.constant 0 : i32
    %c0_i32_1 = arith.constant 0 : i32
    return %c0_i32, %c0_i32_0 : i32, i32
  }
  func.func @transform_4(%arg0: i32, %arg1: i32) -> (i32, i32, i32) {
    %c0_i32 = arith.constant 0 : i32
    %c0_i32_0 = arith.constant 0 : i32
    %c0_i32_1 = arith.constant 0 : i32
    return %arg0, %c0_i32, %c0_i32_0 : i32, i32, i32
  }
}

</mosaic_0001>

<llo_original>
// kernel: tpu_custom_call.1
$region0: #{tpu_custom_call.1}
  #allocation0 [shape = 'u32[]', space=smem, size = 0x4, offset = 0x4, fixed_abs, tag = 'smem constant byte address 0x4 - core index']
  #allocation1 [shape = 'u32[144,128]{1,0:T(1,128)}', space=vmem, size = 0x12000, scoped, tag = 'internal scratch']
  #allocation2 [shape = 'f32[1,13,6]{2,1,0:T(8,128)}', space=vmem, size = 0x2000, scoped, tag = 'scratch operand']
  %s0 = inlined_call_operand.hbm [shape: f32[2,4,16,16], index: 0, kind: input, shape index: {}]
  %s1 = inlined_call_operand.hbm [shape: f32[2,4,16,16], index: 1, kind: input, shape index: {}]
  %s2 = inlined_call_operand.vmem [shape: f32[4,16], index: 2, kind: input, shape index: {}]
  %s3 = inlined_call_operand.vmem [shape: f32[16,6], index: 3, kind: input, shape index: {}]
  %s4 = inlined_call_operand.hbm [shape: f32[2,2,2], index: 4, kind: output, shape index: {}]
  %s5 = sld [smem:[#allocation0]]
  $region65: #{tpu_custom_call.1} parent=0
    _
  %s7 = ssub.s32 1, %s5
  %s8 = scalar_select 0, %s7, %s5
  $region1: #{tpu_custom_call.1} parent=0
    #allocation3 [shape = 'u8[65536]{0}', space=vmem, size = 0x10000, scoped, tag = 'input window, operand 0']
    #allocation4 [shape = 's32[2]{0}', space=sflag, size = 0x8, scoped, tag = 'scoped memory for tpu_custom_call.1']
    #allocation5 [shape = 's32[2]{0}', space=sflag, size = 0x8, scoped, tag = 'scoped memory for tpu_custom_call.1']
    #allocation6 [shape = 'u8[65536]{0}', space=vmem, size = 0x10000, scoped, tag = 'input window, operand 1']
    #allocation7 [shape = 's32[2]{0}', space=sflag, size = 0x8, scoped, tag = 'scoped memory for tpu_custom_call.1']
    #allocation8 [shape = 'u8[2048]{0}', space=vmem, size = 0x800, scoped, tag = 'output window, operand 0']
    %9 = vsyncpa [#allocation4], 0
    %s10 = scalar_lea.sflag [#allocation4], 1
    %11 = vsyncpa %s10, 0
    %12 = vsyncpa [#allocation7], 0
    %s13 = scalar_lea.sflag [#allocation7], 1
    %14 = vsyncpa %s13, 0
    %15 = vsyncpa [#allocation5], 0
    %s16 = scalar_lea.sflag [#allocation5], 1
    %17 = vsyncpa %s16, 0
    loop: start=0, step=1, limit=4
    $region2: #{tpu_custom_call.1} parent=1 // loop_pre_header
      _
    $region3: #{tpu_custom_call.1} parent=1 // loop_header
      %s19 = sphi 0, %s23
      %p20 = scmp.ge.s32.totalorder %s19, 4
      %s26 = sphi 0, %s38
      %s27 = sphi 0, %s34
      %s28 = sphi 0, %s26
      %s29 = sphi 0, %s27
      %s30 = sphi 0, %s28
      %s31 = sphi 0, %s29
      %s43 = sphi 0, %s45
      %s46 = sphi 0, %s43
      %s47 = sphi 0, %s46
      %s63 = sphi 0, %s47
      %s71 = sphi 0, %s73
      %s74 = sphi 0, %s71
      %s75 = sphi 0, %s74
      %s91 = sphi 0, %s75
      %s95 = sphi 0, %s95
      %s97 = sphi 0, %s95
      %s98 = sphi 0, %s97
      %s112 = sphi 0, %s98
      %s116 = sphi 0, %s116
      %s118 = sphi 0, %s116
      %s119 = sphi 0, %s118
      %s133 = sphi 0, %s119
      %s139 = sphi 0, %s141
      %s142 = sphi 0, %s139
      %s143 = sphi 0, %s142
      %s159 = sphi 0, %s143
    $region4: #{tpu_custom_call.1} parent=1 // loop_header_branch
      %22 = sbr.rel (%p20) target = $region8
    $region5: #{tpu_custom_call.1} parent=1 // loop_body
      %s24 = ssub.s32 %s19, 1
      %s25 = ssub.s32 %s19, 2
      %s32 = sadd.s32 1, %s27
      %p33 = scmp.ge.s32.totalorder %s32, 1
      %s34 = scalar_select %p33, 0, %s32
      %s35 = sadd.s32 1, %s26
      %s36 = scalar_select %p33, %s35, %s26
      %p37 = scmp.ge.s32.totalorder %s36, 2
      %s38 = scalar_select %p37, 0, %s36
      %s39 = ssub.s32 %s26, %s38
      %s40 = ssub.s32 %s27, %s34
      %s41 = sor.u32 %s39, %s40
      %p42 = scmp.eq.s32.totalorder %s41, 0
      %s44 = sadd.s32 %s43, 1
      %s45 = scalar_select %p42, %s43, %s44
      %p48 = pneg %p42
      %p49 = scmp.eq.s32.totalorder %s19, 1
      %p50 = por %p48, %p49
      %p51 = scmp.ne.s32.totalorder %s43, %s46
      %p52 = scmp.eq.s32.totalorder %s19, 0
      %p53 = por %p51, %p52
      %p54 = scmp.ne.s32.totalorder %s43, %s46
      %p55 = scmp.eq.s32.totalorder %s24, 1
      %p56 = por %p54, %p55
      %p57 = scmp.ne.s32.totalorder %s46, %s47
      %p58 = scmp.eq.s32.totalorder %s24, 0
      %p59 = por %p57, %p58
      %p60 = scmp.ne.s32.totalorder %s46, %s47
      %p61 = scmp.eq.s32.totalorder %s25, 1
      %p62 = por %p60, %p61
      %p64 = scmp.ne.s32.totalorder %s47, %s63
      %p65 = scmp.eq.s32.totalorder %s25, 0
      %p66 = por %p64, %p65
      %s67 = ssub.s32 %s26, %s38
      %s68 = ssub.s32 %s27, %s34
      %s69 = sor.u32 %s67, %s68
      %p70 = scmp.eq.s32.totalorder %s69, 0
      %s72 = sadd.s32 %s71, 1
      %s73 = scalar_select %p70, %s71, %s72
      %p76 = pneg %p70
      %p77 = scmp.eq.s32.totalorder %s19, 1
      %p78 = por %p76, %p77
      %p79 = scmp.ne.s32.totalorder %s71, %s74
      %p80 = scmp.eq.s32.totalorder %s19, 0
      %p81 = por %p79, %p80
      %p82 = scmp.ne.s32.totalorder %s71, %s74
      %p83 = scmp.eq.s32.totalorder %s24, 1
      %p84 = por %p82, %p83
      %p85 = scmp.ne.s32.totalorder %s74, %s75
      %p86 = scmp.eq.s32.totalorder %s24, 0
      %p87 = por %p85, %p86
      %p88 = scmp.ne.s32.totalorder %s74, %s75
      %p89 = scmp.eq.s32.totalorder %s25, 1
      %p90 = por %p88, %p89
      %p92 = scmp.ne.s32.totalorder %s75, %s91
      %p93 = scmp.eq.s32.totalorder %s25, 0
      %p94 = por %p92, %p93
      %s96 = sadd.s32 %s95, 1
      %p99 = scmp.eq.s32.totalorder %s19, 1
      %p100 = scmp.ne.s32.totalorder %s95, %s97
      %p101 = scmp.eq.s32.totalorder %s19, 0
      %p102 = por %p100, %p101
      %p103 = scmp.ne.s32.totalorder %s95, %s97
      %p104 = scmp.eq.s32.totalorder %s24, 1
      %p105 = por %p103, %p104
      %p106 = scmp.ne.s32.totalorder %s97, %s98
      %p107 = scmp.eq.s32.totalorder %s24, 0
      %p108 = por %p106, %p107
      %p109 = scmp.ne.s32.totalorder %s97, %s98
      %p110 = scmp.eq.s32.totalorder %s25, 1
      %p111 = por %p109, %p110
      %p113 = scmp.ne.s32.totalorder %s98, %s112
      %p114 = scmp.eq.s32.totalorder %s25, 0
      %p115 = por %p113, %p114
      %s117 = sadd.s32 %s116, 1
      %p120 = scmp.eq.s32.totalorder %s19, 1
      %p121 = scmp.ne.s32.totalorder %s116, %s118
      %p122 = scmp.eq.s32.totalorder %s19, 0
      %p123 = por %p121, %p122
      %p124 = scmp.ne.s32.totalorder %s116, %s118
      %p125 = scmp.eq.s32.totalorder %s24, 1
      %p126 = por %p124, %p125
      %p127 = scmp.ne.s32.totalorder %s118, %s119
      %p128 = scmp.eq.s32.totalorder %s24, 0
      %p129 = por %p127, %p128
      %p130 = scmp.ne.s32.totalorder %s118, %s119
      %p131 = scmp.eq.s32.totalorder %s25, 1
      %p132 = por %p130, %p131
      %p134 = scmp.ne.s32.totalorder %s119, %s133
      %p135 = scmp.eq.s32.totalorder %s25, 0
      %p136 = por %p134, %p135
      %s137 = ssub.s32 %s26, %s38
      %p138 = scmp.eq.s32.totalorder %s137, 0
      %s140 = sadd.s32 %s139, 1
      %s141 = scalar_select %p138, %s139, %s140
      %p144 = pneg %p138
      %p145 = scmp.eq.s32.totalorder %s19, 1
      %p146 = por %p144, %p145
      %p147 = scmp.ne.s32.totalorder %s139, %s142
      %p148 = scmp.eq.s32.totalorder %s19, 0
      %p149 = por %p147, %p148
      %p150 = scmp.ne.s32.totalorder %s139, %s142
      %p151 = scmp.eq.s32.totalorder %s24, 1
      %p152 = por %p150, %p151
      %p153 = scmp.ne.s32.totalorder %s142, %s143
      %p154 = scmp.eq.s32.totalorder %s24, 0
      %p155 = por %p153, %p154
      %p156 = scmp.ne.s32.totalorder %s142, %s143
      %p157 = scmp.eq.s32.totalorder %s25, 1
      %p158 = por %p156, %p157
      %p160 = scmp.ne.s32.totalorder %s143, %s159
      %p161 = scmp.eq.s32.totalorder %s25, 0
      %p162 = por %p160, %p161
      %p163 = scmp.le.s32.totalorder 1, %s19
      %p164 = scmp.lt.s32.totalorder %s19, 3
      %p165 = pnand %p163, %p164
      %p166 = pneg %p165
      // Predicated region
      $region9: #{tpu_custom_call.1} parent=5 // pred_check
        _
      $region10: #{tpu_custom_call.1} parent=5 // pred_check_branch
        %168 = sbr.rel (%p165) target = $region12
      $region11: #{tpu_custom_call.1} parent=5 // pred_region
        %s169 = ssub.s32 %s19, 1
        // Predicated region
        $region13: #{tpu_custom_call.1} parent=11 // pred_check
          %p170 = pneg %p108
        $region14: #{tpu_custom_call.1} parent=11 // pred_check_branch
          %172 = sbr.rel (%p170) target = $region16
        $region15: #{tpu_custom_call.1} parent=11 // pred_region
          _
        $region16: #{tpu_custom_call.1} parent=11 // pred_fallthru
          _
        // Predicated region
        $region17: #{tpu_custom_call.1} parent=11 // pred_check
          %p173 = pneg %p129
        $region18: #{tpu_custom_call.1} parent=11 // pred_check_branch
          %175 = sbr.rel (%p173) target = $region20
        $region19: #{tpu_custom_call.1} parent=11 // pred_region
          _
        $region20: #{tpu_custom_call.1} parent=11 // pred_fallthru
          _
      $region12: #{tpu_custom_call.1} parent=5 // pred_fallthru
        _
      %p176 = scmp.lt.s32.totalorder %s19, 2
      // Predicated region
      $region21: #{tpu_custom_call.1} parent=5 // pred_check
        %p177 = pneg %p176
      $region22: #{tpu_custom_call.1} parent=5 // pred_check_branch
        %179 = sbr.rel (%p177) target = $region24
      $region23: #{tpu_custom_call.1} parent=5 // pred_region
        // Predicated region
        $region25: #{tpu_custom_call.1} parent=23 // pred_check
          %p180 = pneg %p53
        $region26: #{tpu_custom_call.1} parent=23 // pred_check_branch
          %182 = sbr.rel (%p180) target = $region28
        $region27: #{tpu_custom_call.1} parent=23 // pred_region
          %s183 = sand.u32 %s43, 1
          %s184 = scalar_lea.sflag [#allocation4], %s183
          %s185 = sand.u32 %s43, 1
          %s186 = smul.addr %s185, 64
          %s187 = scalar_lea.vmem [#allocation3], %s186
          %s188 = smul.u32 2, %s27
          %s190 = ssub.s32 1024, 1024
          %191 = vsyncadd %s184, %s190
          %s192 = smul.addr %s26, 8
          %s193 = sadd.s32 %s188, %s192
          %s194 = smul.addr %s193, 128
          %s195 = scalar_lea.hbm %s0, %s194
          %s196 = sshll.u32 %s187, 4
          %s197 = int_to_ptr.vmem [resolvable:$true] %s196
          %202 = dma.hbm_to_vmem [thread:$0]  %s195, 1024, %s197, %s184, 128, 128, 8
        $region28: #{tpu_custom_call.1} parent=23 // pred_fallthru
          _
        // Predicated region
        $region29: #{tpu_custom_call.1} parent=23 // pred_check
          %p203 = pneg %p81
        $region30: #{tpu_custom_call.1} parent=23 // pred_check_branch
          %205 = sbr.rel (%p203) target = $region32
        $region31: #{tpu_custom_call.1} parent=23 // pred_region
          %s206 = sand.u32 %s71, 1
          %s207 = scalar_lea.sflag [#allocation7], %s206
          %s208 = sand.u32 %s71, 1
          %s209 = smul.addr %s208, 64
          %s210 = scalar_lea.vmem [#allocation6], %s209
          %s211 = smul.u32 2, %s27
          %s213 = ssub.s32 1024, 1024
          %214 = vsyncadd %s207, %s213
          %s215 = smul.addr %s26, 8
          %s216 = sadd.s32 %s211, %s215
          %s217 = smul.addr %s216, 128
          %s218 = scalar_lea.hbm %s1, %s217
          %s219 = sshll.u32 %s210, 4
          %s220 = int_to_ptr.vmem [resolvable:$true] %s219
          %225 = dma.hbm_to_vmem [thread:$0]  %s218, 1024, %s220, %s207, 128, 128, 8
        $region32: #{tpu_custom_call.1} parent=23 // pred_fallthru
          _
      $region24: #{tpu_custom_call.1} parent=5 // pred_fallthru
        _
      %p226 = scmp.le.s32.totalorder 1, %s19
      %p227 = scmp.lt.s32.totalorder %s19, 3
      %p228 = pnand %p226, %p227
      %p229 = pneg %p228
      // Predicated region
      $region33: #{tpu_custom_call.1} parent=5 // pred_check
        _
      $region34: #{tpu_custom_call.1} parent=5 // pred_check_branch
        %231 = sbr.rel (%p228) target = $region36
      $region35: #{tpu_custom_call.1} parent=5 // pred_region
        %s232 = ssub.s32 %s19, 1
        %s233 = sand.u32 %s46, 1
        %s234 = scalar_lea.sflag [#allocation4], %s233
        %s235 = sand.u32 %s46, 1
        %s236 = smul.addr %s235, 64
        %s237 = scalar_lea.vmem [#allocation3], %s236
        // Predicated region
        $region37: #{tpu_custom_call.1} parent=35 // pred_check
          %p238 = pneg %p59
        $region38: #{tpu_custom_call.1} parent=35 // pred_check_branch
          %240 = sbr.rel (%p238) target = $region40
        $region39: #{tpu_custom_call.1} parent=35 // pred_region
          %241 = dma.done %s234, 1024
        $region40: #{tpu_custom_call.1} parent=35 // pred_fallthru
          _
        %s242 = sand.u32 %s74, 1
        %s243 = scalar_lea.sflag [#allocation7], %s242
        %s244 = sand.u32 %s74, 1
        %s245 = smul.addr %s244, 64
        %s246 = scalar_lea.vmem [#allocation6], %s245
        // Predicated region
        $region41: #{tpu_custom_call.1} parent=35 // pred_check
          %p247 = pneg %p87
        $region42: #{tpu_custom_call.1} parent=35 // pred_check_branch
          %249 = sbr.rel (%p247) target = $region44
        $region43: #{tpu_custom_call.1} parent=35 // pred_region
          %250 = dma.done %s243, 1024
        $region44: #{tpu_custom_call.1} parent=35 // pred_fallthru
          _
        %s251 = sand.u32 %s46, 1
        %s252 = scalar_lea.sflag [#allocation4], %s251
        %s253 = sand.u32 %s46, 1
        %s254 = smul.addr %s253, 64
        %s255 = scalar_lea.vmem [#allocation3], %s254
        %p256 = pneg %p59
        %p257 = pneg %p56
        %s258 = sand.u32 %s74, 1
        %s259 = scalar_lea.sflag [#allocation7], %s258
        %s260 = sand.u32 %s74, 1
        %s261 = smul.addr %s260, 64
        %s262 = scalar_lea.vmem [#allocation6], %s261
        %p263 = pneg %p87
        %p264 = pneg %p84
        %p265 = pneg %p108
        %p266 = pneg %p105
        %p267 = pneg %p129
        %p268 = pneg %p126
        %p269 = pneg %p155
        %p270 = pneg %p152
        %s271 = sand.u32 %s142, 1
        %s272 = scalar_lea.sflag [#allocation5], %s271
        %s273 = sand.u32 %s142, 1
        %s274 = smul.addr %s273, 2
        %s275 = scalar_lea.vmem [#allocation8], %s274
        %s276 = smul.u32 2, %s29
        %s277 = smul.u32 2, %s29
        %p278 = scmp.eq.s32.totalorder %s29, 0
        // Predicated region
        $region45: #{tpu_custom_call.1} parent=35 // pred_check
          %p279 = pneg %p278
        $region46: #{tpu_custom_call.1} parent=35 // pred_check_branch
          %281 = sbr.rel (%p279) target = $region48
        $region47: #{tpu_custom_call.1} parent=35 // pred_region
          %vm282 = vcmask 48128
          %283 = vst.msk [vmem:[#allocation2] sm:$0xff] %vm282, 0.0
          %vm284 = vcmask 45056
          %285 = vst.msk [vmem:[#allocation2 + $0x8] sm:$0x1f] %vm284, 0.0
        $region48: #{tpu_custom_call.1} parent=35 // pred_fallthru
          _
        %v286 = vld [vmem:[%s237] sm:$0xff]
        %v287 = vld [vmem:[%s237 + $0x8] sm:$0xff]
        %v288 = vld [vmem:[%s246] sm:$0xff]
        %v289 = vld [vmem:[%s246 + $0x8] sm:$0xff]
        %v290 = vsub.f32 %v286, %v288
        %v291 = vsub.f32 %v287, %v289
        %s292 = scalar_lea.vmem %s237, 16 [#allocation3]
        %v293 = vld [vmem:[%s292] sm:$0xff]
        %v294 = vld [vmem:[%s292 + $0x8] sm:$0xff]
        %s295 = scalar_lea.vmem %s246, 16 [#allocation6]
        %v296 = vld [vmem:[%s295] sm:$0xff]
        %v297 = vld [vmem:[%s295 + $0x8] sm:$0xff]
        %v298 = vsub.f32 %v293, %v296
        %v299 = vsub.f32 %v294, %v297
        %v300 = vadd.f32 %v290, %v298
        %v301 = vadd.f32 %v291, %v299
        %s302 = scalar_lea.vmem %s237, 32 [#allocation3]
        %v303 = vld [vmem:[%s302] sm:$0xff]
        %v304 = vld [vmem:[%s302 + $0x8] sm:$0xff]
        %s305 = scalar_lea.vmem %s246, 32 [#allocation6]
        %v306 = vld [vmem:[%s305] sm:$0xff]
        %v307 = vld [vmem:[%s305 + $0x8] sm:$0xff]
        %v308 = vsub.f32 %v303, %v306
        %v309 = vsub.f32 %v304, %v307
        %v310 = vadd.f32 %v300, %v308
        %v311 = vadd.f32 %v301, %v309
        %s312 = scalar_lea.vmem %s237, 48 [#allocation3]
        %v313 = vld [vmem:[%s312] sm:$0xff]
        %v314 = vld [vmem:[%s312 + $0x8] sm:$0xff]
        %s315 = scalar_lea.vmem %s246, 48 [#allocation6]
        %v316 = vld [vmem:[%s315] sm:$0xff]
        %v317 = vld [vmem:[%s315 + $0x8] sm:$0xff]
        %v318 = vsub.f32 %v313, %v316
        %v319 = vsub.f32 %v314, %v317
        %v320 = vadd.f32 %v310, %v318
        %v321 = vadd.f32 %v311, %v319
        %v322 = vld [vmem:[%s2] sm:$0xf]
        %v323 = vld [vmem:[%s3] sm:$0xff]
        %v324 = vld [vmem:[%s3 + $0x8] sm:$0xff]
        %vm325 = vcmask 130048
        %v327 = vsel %vm325, %v322, 0
        %329 = vmatprep.subr.mxu0 0.0
        %330 = vmatpush1.msra.mxu0 0.0
        %331 = vmatprep.subr.mxu0 0.0
        %332 = vmatpush1.msra.mxu0 0.0
        %333 = vmatprep.subr.mxu0 0.0
        %334 = vmatpush1.msra.mxu0 0.0
        %335 = vmatprep.subr.mxu0 0.0
        %336 = vmatpush1.msra.mxu0 0.0
        %337 = vmatprep.subr.mxu0 0.0
        %338 = vmatpush1.msra.mxu0 0.0
        %339 = vmatprep.subr.mxu0 0.0
        %340 = vmatpush1.msra.mxu0 0.0
        %341 = vmatprep.subr.mxu0 0.0
        %342 = vmatpush1.msra.mxu0 0.0
        %343 = vmatprep.subr.mxu0 0.0
        %344 = vmatpush1.msra.mxu0 0.0
        %345 = vmatprep.subr.mxu0 0.0
        %346 = vmatpush1.msra.mxu0 0.0
        %347 = vmatprep.subr.mxu0 0.0
        %348 = vmatpush1.msra.mxu0 0.0
        %349 = vmatprep.subr.mxu0 0.0
        %350 = vmatpush1.msra.mxu0 0.0
        %351 = vmatprep.subr.mxu0 0.0
        %352 = vmatpush1.msra.mxu0 0.0
        %353 = vmatprep.subr.mxu0 0.0
        %354 = vmatpush1.msra.mxu0 0.0
        %355 = vmatprep.subr.mxu0 0.0
        %356 = vmatpush1.msra.mxu0 0.0
        %357 = vmatprep.subr.mxu0 0.0
        %v358 = vand.u32 %v321, 4294901760
        %359 = vmatpush1.msra.mxu0 %v358
        %360 = vmatprep.subr.mxu0 0.0
        %v361 = vand.u32 %v320, 4294901760
        %362 = vmatpush1.msra.mxu0 %v361
        %363 = vmatprep.subr.mxu0 0.0
        %364 = vmatpush2.msra.mxu0 0.0
        %365 = vmatprep.subr.mxu0 0.0
        %366 = vmatpush2.msra.mxu0 0.0
        %367 = vmatprep.subr.mxu0 0.0
        %368 = vmatpush2.msra.mxu0 0.0
        %369 = vmatprep.subr.mxu0 0.0
        %370 = vmatpush2.msra.mxu0 0.0
        %371 = vmatprep.subr.mxu0 0.0
        %372 = vmatpush2.msra.mxu0 0.0
        %373 = vmatprep.subr.mxu0 0.0
        %374 = vmatpush2.msra.mxu0 0.0
        %375 = vmatprep.subr.mxu0 0.0
        %376 = vmatpush2.msra.mxu0 0.0
        %377 = vmatprep.subr.mxu0 0.0
        %378 = vmatpush2.msra.mxu0 0.0
        %379 = vmatprep.subr.mxu0 0.0
        %380 = vmatpush2.msra.mxu0 0.0
        %381 = vmatprep.subr.mxu0 0.0
        %382 = vmatpush2.msra.mxu0 0.0
        %383 = vmatprep.subr.mxu0 0.0
        %384 = vmatpush2.msra.mxu0 0.0
        %385 = vmatprep.subr.mxu0 0.0
        %386 = vmatpush2.msra.mxu0 0.0
        %387 = vmatprep.subr.mxu0 0.0
        %388 = vmatpush2.msra.mxu0 0.0
        %389 = vmatprep.subr.mxu0 0.0
        %390 = vmatpush2.msra.mxu0 0.0
        %391 = vmatprep.subr.mxu0 0.0
        %392 = vmatpush2.msra.mxu0 0.0
        %393 = vmatprep.subr.mxu0 0.0
        %394 = vmatpush2.msra.mxu0 0.0
        %395 = vmatprep.mubr.f32.mxu0 0.0
        %v396 = vand.u32 %v327, 4294901760
        %v397 = vsub.f32 %v327, %v396
        %v398 = vand.u32 %v397, 4294901760
        %v399 = vsub.f32 %v397, %v398
        %v400 = vand.u32 %v399, 4294901760
        %401 = vmatmul.mubr.f32.gmra.mxu0 %v400
        %v402 = vpop.f32.mrf.mxu0
        %v403 = vadd.f32 0.0, %v402
        %v404 = vpop.f32.mrf.mxu0
        %405 = vdwg.mxu0
        %406 = vmatprep.subr.mxu0 0.0
        %407 = vmatpush1.msra.mxu0 0.0
        %408 = vmatprep.subr.mxu0 0.0
        %409 = vmatpush1.msra.mxu0 0.0
        %410 = vmatprep.subr.mxu0 0.0
        %411 = vmatpush1.msra.mxu0 0.0
        %412 = vmatprep.subr.mxu0 0.0
        %413 = vmatpush1.msra.mxu0 0.0
        %414 = vmatprep.subr.mxu0 0.0
        %415 = vmatpush1.msra.mxu0 0.0
        %416 = vmatprep.subr.mxu0 0.0
        %417 = vmatpush1.msra.mxu0 0.0
        %418 = vmatprep.subr.mxu0 0.0
        %419 = vmatpush1.msra.mxu0 0.0
        %420 = vmatprep.subr.mxu0 0.0
        %421 = vmatpush1.msra.mxu0 0.0
        %422 = vmatprep.subr.mxu0 0.0
        %423 = vmatpush1.msra.mxu0 0.0
        %424 = vmatprep.subr.mxu0 0.0
        %425 = vmatpush1.msra.mxu0 0.0
        %426 = vmatprep.subr.mxu0 0.0
        %427 = vmatpush1.msra.mxu0 0.0
        %428 = vmatprep.subr.mxu0 0.0
        %429 = vmatpush1.msra.mxu0 0.0
        %430 = vmatprep.subr.mxu0 0.0
        %431 = vmatpush1.msra.mxu0 0.0
        %432 = vmatprep.subr.mxu0 0.0
        %433 = vmatpush1.msra.mxu0 0.0
        %434 = vmatprep.subr.mxu0 0.0
        %v435 = vand.u32 %v321, 4294901760
        %v436 = vsub.f32 %v321, %v435
        %v437 = vand.u32 %v436, 4294901760
        %v438 = vsub.f32 %v436, %v437
        %v439 = vand.u32 %v438, 4294901760
        %440 = vmatpush1.msra.mxu0 %v439
        %441 = vmatprep.subr.mxu0 0.0
        %v442 = vand.u32 %v320, 4294901760
        %v443 = vsub.f32 %v320, %v442
        %v444 = vand.u32 %v443, 4294901760
        %v445 = vsub.f32 %v443, %v444
        %v446 = vand.u32 %v445, 4294901760
        %447 = vmatpush1.msra.mxu0 %v446
        %448 = vmatprep.subr.mxu0 0.0
        %449 = vmatpush2.msra.mxu0 0.0
        %450 = vmatprep.subr.mxu0 0.0
        %451 = vmatpush2.msra.mxu0 0.0
        %452 = vmatprep.subr.mxu0 0.0
        %453 = vmatpush2.msra.mxu0 0.0
        %454 = vmatprep.subr.mxu0 0.0
        %455 = vmatpush2.msra.mxu0 0.0
        %456 = vmatprep.subr.mxu0 0.0
        %457 = vmatpush2.msra.mxu0 0.0
        %458 = vmatprep.subr.mxu0 0.0
        %459 = vmatpush2.msra.mxu0 0.0
        %460 = vmatprep.subr.mxu0 0.0
        %461 = vmatpush2.msra.mxu0 0.0
        %462 = vmatprep.subr.mxu0 0.0
        %463 = vmatpush2.msra.mxu0 0.0
        %464 = vmatprep.subr.mxu0 0.0
        %465 = vmatpush2.msra.mxu0 0.0
        %466 = vmatprep.subr.mxu0 0.0
        %467 = vmatpush2.msra.mxu0 0.0
        %468 = vmatprep.subr.mxu0 0.0
        %469 = vmatpush2.msra.mxu0 0.0
        %470 = vmatprep.subr.mxu0 0.0
        %471 = vmatpush2.msra.mxu0 0.0
        %472 = vmatprep.subr.mxu0 0.0
        %473 = vmatpush2.msra.mxu0 0.0
        %474 = vmatprep.subr.mxu0 0.0
        %475 = vmatpush2.msra.mxu0 0.0
        %476 = vmatprep.subr.mxu0 0.0
        %477 = vmatpush2.msra.mxu0 0.0
        %478 = vmatprep.subr.mxu0 0.0
        %479 = vmatpush2.msra.mxu0 0.0
        %480 = vmatprep.mubr.f32.mxu0 0.0
        %v481 = vand.u32 %v327, 4294901760
        %482 = vmatmul.mubr.f32.gmra.mxu0 %v481
        %v483 = vpop.f32.mrf.mxu0
        %v484 = vadd.f32 %v403, %v483
        %v485 = vpop.f32.mrf.mxu0
        %486 = vdwg.mxu0
        %487 = vmatprep.subr.mxu0 0.0
        %488 = vmatpush1.msra.mxu0 0.0
        %489 = vmatprep.subr.mxu0 0.0
        %490 = vmatpush1.msra.mxu0 0.0
        %491 = vmatprep.subr.mxu0 0.0
        %492 = vmatpush1.msra.mxu0 0.0
        %493 = vmatprep.subr.mxu0 0.0
        %494 = vmatpush1.msra.mxu0 0.0
        %495 = vmatprep.subr.mxu0 0.0
        %496 = vmatpush1.msra.mxu0 0.0
        %497 = vmatprep.subr.mxu0 0.0
        %498 = vmatpush1.msra.mxu0 0.0
        %499 = vmatprep.subr.mxu0 0.0
        %500 = vmatpush1.msra.mxu0 0.0
        %501 = vmatprep.subr.mxu0 0.0
        %502 = vmatpush1.msra.mxu0 0.0
        %503 = vmatprep.subr.mxu0 0.0
        %504 = vmatpush1.msra.mxu0 0.0
        %505 = vmatprep.subr.mxu0 0.0
        %506 = vmatpush1.msra.mxu0 0.0
        %507 = vmatprep.subr.mxu0 0.0
        %508 = vmatpush1.msra.mxu0 0.0
        %509 = vmatprep.subr.mxu0 0.0
        %510 = vmatpush1.msra.mxu0 0.0
        %511 = vmatprep.subr.mxu0 0.0
        %512 = vmatpush1.msra.mxu0 0.0
        %513 = vmatprep.subr.mxu0 0.0
        %514 = vmatpush1.msra.mxu0 0.0
        %515 = vmatprep.subr.mxu0 0.0
        %v516 = vand.u32 %v321, 4294901760
        %v517 = vsub.f32 %v321, %v516
        %518 = vmatpush1.msra.mxu0 %v517
        %519 = vmatprep.subr.mxu0 0.0
        %v520 = vand.u32 %v320, 4294901760
        %v521 = vsub.f32 %v320, %v520
        %522 = vmatpush1.msra.mxu0 %v521
        %523 = vmatprep.subr.mxu0 0.0
        %524 = vmatpush2.msra.mxu0 0.0
        %525 = vmatprep.subr.mxu0 0.0
        %526 = vmatpush2.msra.mxu0 0.0
        %527 = vmatprep.subr.mxu0 0.0
        %528 = vmatpush2.msra.mxu0 0.0
        %529 = vmatprep.subr.mxu0 0.0
        %530 = vmatpush2.msra.mxu0 0.0
        %531 = vmatprep.subr.mxu0 0.0
        %532 = vmatpush2.msra.mxu0 0.0
        %533 = vmatprep.subr.mxu0 0.0
        %534 = vmatpush2.msra.mxu0 0.0
        %535 = vmatprep.subr.mxu0 0.0
        %536 = vmatpush2.msra.mxu0 0.0
        %537 = vmatprep.subr.mxu0 0.0
        %538 = vmatpush2.msra.mxu0 0.0
        %539 = vmatprep.subr.mxu0 0.0
        %540 = vmatpush2.msra.mxu0 0.0
        %541 = vmatprep.subr.mxu0 0.0
        %542 = vmatpush2.msra.mxu0 0.0
        %543 = vmatprep.subr.mxu0 0.0
        %544 = vmatpush2.msra.mxu0 0.0
        %545 = vmatprep.subr.mxu0 0.0
        %546 = vmatpush2.msra.mxu0 0.0
        %547 = vmatprep.subr.mxu0 0.0
        %548 = vmatpush2.msra.mxu0 0.0
        %549 = vmatprep.subr.mxu0 0.0
        %550 = vmatpush2.msra.mxu0 0.0
        %551 = vmatprep.subr.mxu0 0.0
        %552 = vmatpush2.msra.mxu0 0.0
        %553 = vmatprep.subr.mxu0 0.0
        %554 = vmatpush2.msra.mxu0 0.0
        %555 = vmatprep.mubr.f32.mxu0 0.0
        %v556 = vand.u32 %v327, 4294901760
        %v557 = vsub.f32 %v327, %v556
        %558 = vmatmul.mubr.f32.gmra.mxu0 %v557
        %v559 = vpop.f32.mrf.mxu0
        %v560 = vadd.f32 %v484, %v559
        %v561 = vpop.f32.mrf.mxu0
        %562 = vdwg.mxu0
        %563 = vmatprep.subr.mxu0 0.0
        %564 = vmatpush1.msra.mxu0 0.0
        %565 = vmatprep.subr.mxu0 0.0
        %566 = vmatpush1.msra.mxu0 0.0
        %567 = vmatprep.subr.mxu0 0.0
        %568 = vmatpush1.msra.mxu0 0.0
        %569 = vmatprep.subr.mxu0 0.0
        %570 = vmatpush1.msra.mxu0 0.0
        %571 = vmatprep.subr.mxu0 0.0
        %572 = vmatpush1.msra.mxu0 0.0
        %573 = vmatprep.subr.mxu0 0.0
        %574 = vmatpush1.msra.mxu0 0.0
        %575 = vmatprep.subr.mxu0 0.0
        %576 = vmatpush1.msra.mxu0 0.0
        %577 = vmatprep.subr.mxu0 0.0
        %578 = vmatpush1.msra.mxu0 0.0
        %579 = vmatprep.subr.mxu0 0.0
        %580 = vmatpush1.msra.mxu0 0.0
        %581 = vmatprep.subr.mxu0 0.0
        %582 = vmatpush1.msra.mxu0 0.0
        %583 = vmatprep.subr.mxu0 0.0
        %584 = vmatpush1.msra.mxu0 0.0
        %585 = vmatprep.subr.mxu0 0.0
        %586 = vmatpush1.msra.mxu0 0.0
        %587 = vmatprep.subr.mxu0 0.0
        %588 = vmatpush1.msra.mxu0 0.0
        %589 = vmatprep.subr.mxu0 0.0
        %590 = vmatpush1.msra.mxu0 0.0
        %591 = vmatprep.subr.mxu0 0.0
        %v592 = vand.u32 %v321, 4294901760
        %593 = vmatpush1.msra.mxu0 %v592
        %594 = vmatprep.subr.mxu0 0.0
        %v595 = vand.u32 %v320, 4294901760
        %596 = vmatpush1.msra.mxu0 %v595
        %597 = vmatprep.subr.mxu0 0.0
        %598 = vmatpush2.msra.mxu0 0.0
        %599 = vmatprep.subr.mxu0 0.0
        %600 = vmatpush2.msra.mxu0 0.0
        %601 = vmatprep.subr.mxu0 0.0
        %602 = vmatpush2.msra.mxu0 0.0
        %603 = vmatprep.subr.mxu0 0.0
        %604 = vmatpush2.msra.mxu0 0.0
        %605 = vmatprep.subr.mxu0 0.0
        %606 = vmatpush2.msra.mxu0 0.0
        %607 = vmatprep.subr.mxu0 0.0
        %608 = vmatpush2.msra.mxu0 0.0
        %609 = vmatprep.subr.mxu0 0.0
        %610 = vmatpush2.msra.mxu0 0.0
        %611 = vmatprep.subr.mxu0 0.0
        %612 = vmatpush2.msra.mxu0 0.0
        %613 = vmatprep.subr.mxu0 0.0
        %614 = vmatpush2.msra.mxu0 0.0
        %615 = vmatprep.subr.mxu0 0.0
        %616 = vmatpush2.msra.mxu0 0.0
        %617 = vmatprep.subr.mxu0 0.0
        %618 = vmatpush2.msra.mxu0 0.0
        %619 = vmatprep.subr.mxu0 0.0
        %620 = vmatpush2.msra.mxu0 0.0
        %621 = vmatprep.subr.mxu0 0.0
        %622 = vmatpush2.msra.mxu0 0.0
        %623 = vmatprep.subr.mxu0 0.0
        %624 = vmatpush2.msra.mxu0 0.0
        %625 = vmatprep.subr.mxu0 0.0
        %626 = vmatpush2.msra.mxu0 0.0
        %627 = vmatprep.subr.mxu0 0.0
        %628 = vmatpush2.msra.mxu0 0.0
        %629 = vmatprep.mubr.f32.mxu0 0.0
        %v630 = vand.u32 %v327, 4294901760
        %v631 = vsub.f32 %v327, %v630
        %v632 = vand.u32 %v631, 4294901760
        %633 = vmatmul.mubr.f32.gmra.mxu0 %v632
        %v634 = vpop.f32.mrf.mxu0
        %v635 = vadd.f32 %v560, %v634
        %v636 = vpop.f32.mrf.mxu0
        %637 = vdwg.mxu0
        %638 = vmatprep.subr.mxu0 0.0
        %639 = vmatpush1.msra.mxu0 0.0
        %640 = vmatprep.subr.mxu0 0.0
        %641 = vmatpush1.msra.mxu0 0.0
        %642 = vmatprep.subr.mxu0 0.0
        %643 = vmatpush1.msra.mxu0 0.0
        %644 = vmatprep.subr.mxu0 0.0
        %645 = vmatpush1.msra.mxu0 0.0
        %646 = vmatprep.subr.mxu0 0.0
        %647 = vmatpush1.msra.mxu0 0.0
        %648 = vmatprep.subr.mxu0 0.0
        %649 = vmatpush1.msra.mxu0 0.0
        %650 = vmatprep.subr.mxu0 0.0
        %651 = vmatpush1.msra.mxu0 0.0
        %652 = vmatprep.subr.mxu0 0.0
        %653 = vmatpush1.msra.mxu0 0.0
        %654 = vmatprep.subr.mxu0 0.0
        %655 = vmatpush1.msra.mxu0 0.0
        %656 = vmatprep.subr.mxu0 0.0
        %657 = vmatpush1.msra.mxu0 0.0
        %658 = vmatprep.subr.mxu0 0.0
        %659 = vmatpush1.msra.mxu0 0.0
        %660 = vmatprep.subr.mxu0 0.0
        %661 = vmatpush1.msra.mxu0 0.0
        %662 = vmatprep.subr.mxu0 0.0
        %663 = vmatpush1.msra.mxu0 0.0
        %664 = vmatprep.subr.mxu0 0.0
        %665 = vmatpush1.msra.mxu0 0.0
        %666 = vmatprep.subr.mxu0 0.0
        %v667 = vand.u32 %v321, 4294901760
        %v668 = vsub.f32 %v321, %v667
        %v669 = vand.u32 %v668, 4294901760
        %670 = vmatpush1.msra.mxu0 %v669
        %671 = vmatprep.subr.mxu0 0.0
        %v672 = vand.u32 %v320, 4294901760
        %v673 = vsub.f32 %v320, %v672
        %v674 = vand.u32 %v673, 4294901760
        %675 = vmatpush1.msra.mxu0 %v674
        %676 = vmatprep.subr.mxu0 0.0
        %677 = vmatpush2.msra.mxu0 0.0
        %678 = vmatprep.subr.mxu0 0.0
        %679 = vmatpush2.msra.mxu0 0.0
        %680 = vmatprep.subr.mxu0 0.0
        %681 = vmatpush2.msra.mxu0 0.0
        %682 = vmatprep.subr.mxu0 0.0
        %683 = vmatpush2.msra.mxu0 0.0
        %684 = vmatprep.subr.mxu0 0.0
        %685 = vmatpush2.msra.mxu0 0.0
        %686 = vmatprep.subr.mxu0 0.0
        %687 = vmatpush2.msra.mxu0 0.0
        %688 = vmatprep.subr.mxu0 0.0
        %689 = vmatpush2.msra.mxu0 0.0
        %690 = vmatprep.subr.mxu0 0.0
        %691 = vmatpush2.msra.mxu0 0.0
        %692 = vmatprep.subr.mxu0 0.0
        %693 = vmatpush2.msra.mxu0 0.0
        %694 = vmatprep.subr.mxu0 0.0
        %695 = vmatpush2.msra.mxu0 0.0
        %696 = vmatprep.subr.mxu0 0.0
        %697 = vmatpush2.msra.mxu0 0.0
        %698 = vmatprep.subr.mxu0 0.0
        %699 = vmatpush2.msra.mxu0 0.0
        %700 = vmatprep.subr.mxu0 0.0
        %701 = vmatpush2.msra.mxu0 0.0
        %702 = vmatprep.subr.mxu0 0.0
        %703 = vmatpush2.msra.mxu0 0.0
        %704 = vmatprep.subr.mxu0 0.0
        %705 = vmatpush2.msra.mxu0 0.0
        %706 = vmatprep.subr.mxu0 0.0
        %707 = vmatpush2.msra.mxu0 0.0
        %708 = vmatprep.mubr.f32.mxu0 0.0
        %v709 = vand.u32 %v327, 4294901760
        %710 = vmatmul.mubr.f32.gmra.mxu0 %v709
        %v711 = vpop.f32.mrf.mxu0
        %v712 = vadd.f32 %v635, %v711
        %v713 = vpop.f32.mrf.mxu0
        %714 = vdwg.mxu0
        %715 = vmatprep.subr.mxu0 0.0
        %716 = vmatpush1.msra.mxu0 0.0
        %717 = vmatprep.subr.mxu0 0.0
        %718 = vmatpush1.msra.mxu0 0.0
        %719 = vmatprep.subr.mxu0 0.0
        %720 = vmatpush1.msra.mxu0 0.0
        %721 = vmatprep.subr.mxu0 0.0
        %722 = vmatpush1.msra.mxu0 0.0
        %723 = vmatprep.subr.mxu0 0.0
        %724 = vmatpush1.msra.mxu0 0.0
        %725 = vmatprep.subr.mxu0 0.0
        %726 = vmatpush1.msra.mxu0 0.0
        %727 = vmatprep.subr.mxu0 0.0
        %728 = vmatpush1.msra.mxu0 0.0
        %729 = vmatprep.subr.mxu0 0.0
        %730 = vmatpush1.msra.mxu0 0.0
        %731 = vmatprep.subr.mxu0 0.0
        %732 = vmatpush1.msra.mxu0 0.0
        %733 = vmatprep.subr.mxu0 0.0
        %734 = vmatpush1.msra.mxu0 0.0
        %735 = vmatprep.subr.mxu0 0.0
        %736 = vmatpush1.msra.mxu0 0.0
        %737 = vmatprep.subr.mxu0 0.0
        %738 = vmatpush1.msra.mxu0 0.0
        %739 = vmatprep.subr.mxu0 0.0
        %740 = vmatpush1.msra.mxu0 0.0
        %741 = vmatprep.subr.mxu0 0.0
        %742 = vmatpush1.msra.mxu0 0.0
        %743 = vmatprep.subr.mxu0 0.0
        %v744 = vand.u32 %v321, 4294901760
        %745 = vmatpush1.msra.mxu0 %v744
        %746 = vmatprep.subr.mxu0 0.0
        %v747 = vand.u32 %v320, 4294901760
        %748 = vmatpush1.msra.mxu0 %v747
        %749 = vmatprep.subr.mxu0 0.0
        %750 = vmatpush2.msra.mxu0 0.0
        %751 = vmatprep.subr.mxu0 0.0
        %752 = vmatpush2.msra.mxu0 0.0
        %753 = vmatprep.subr.mxu0 0.0
        %754 = vmatpush2.msra.mxu0 0.0
        %755 = vmatprep.subr.mxu0 0.0
        %756 = vmatpush2.msra.mxu0 0.0
        %757 = vmatprep.subr.mxu0 0.0
        %758 = vmatpush2.msra.mxu0 0.0
        %759 = vmatprep.subr.mxu0 0.0
        %760 = vmatpush2.msra.mxu0 0.0
        %761 = vmatprep.subr.mxu0 0.0
        %762 = vmatpush2.msra.mxu0 0.0
        %763 = vmatprep.subr.mxu0 0.0
        %764 = vmatpush2.msra.mxu0 0.0
        %765 = vmatprep.subr.mxu0 0.0
        %766 = vmatpush2.msra.mxu0 0.0
        %767 = vmatprep.subr.mxu0 0.0
        %768 = vmatpush2.msra.mxu0 0.0
        %769 = vmatprep.subr.mxu0 0.0
        %770 = vmatpush2.msra.mxu0 0.0
        %771 = vmatprep.subr.mxu0 0.0
        %772 = vmatpush2.msra.mxu0 0.0
        %773 = vmatprep.subr.mxu0 0.0
        %774 = vmatpush2.msra.mxu0 0.0
        %775 = vmatprep.subr.mxu0 0.0
        %776 = vmatpush2.msra.mxu0 0.0
        %777 = vmatprep.subr.mxu0 0.0
        %778 = vmatpush2.msra.mxu0 0.0
        %779 = vmatprep.subr.mxu0 0.0
        %780 = vmatpush2.msra.mxu0 0.0
        %781 = vmatprep.mubr.f32.mxu0 0.0
        %v782 = vand.u32 %v327, 4294901760
        %783 = vmatmul.mubr.f32.gmra.mxu0 %v782
        %v784 = vpop.f32.mrf.mxu0
        %v785 = vadd.f32 %v712, %v784
        %v786 = vpop.f32.mrf.mxu0
        %787 = vdwg.mxu0
        %v789 = vsel %vm325, %v785, 0
        %791 = vmatprep.subr.mxu0 0.0
        %792 = vmatpush1.msra.mxu0 0.0
        %793 = vmatprep.subr.mxu0 0.0
        %794 = vmatpush1.msra.mxu0 0.0
        %795 = vmatprep.subr.mxu0 0.0
        %796 = vmatpush1.msra.mxu0 0.0
        %797 = vmatprep.subr.mxu0 0.0
        %798 = vmatpush1.msra.mxu0 0.0
        %799 = vmatprep.subr.mxu0 0.0
        %800 = vmatpush1.msra.mxu0 0.0
        %801 = vmatprep.subr.mxu0 0.0
        %802 = vmatpush1.msra.mxu0 0.0
        %803 = vmatprep.subr.mxu0 0.0
        %804 = vmatpush1.msra.mxu0 0.0
        %805 = vmatprep.subr.mxu0 0.0
        %806 = vmatpush1.msra.mxu0 0.0
        %807 = vmatprep.subr.mxu0 0.0
        %808 = vmatpush1.msra.mxu0 0.0
        %809 = vmatprep.subr.mxu0 0.0
        %810 = vmatpush1.msra.mxu0 0.0
        %811 = vmatprep.subr.mxu0 0.0
        %812 = vmatpush1.msra.mxu0 0.0
        %813 = vmatprep.subr.mxu0 0.0
        %814 = vmatpush1.msra.mxu0 0.0
        %815 = vmatprep.subr.mxu0 0.0
        %816 = vmatpush1.msra.mxu0 0.0
        %817 = vmatprep.subr.mxu0 0.0
        %818 = vmatpush1.msra.mxu0 0.0
        %819 = vmatprep.subr.mxu0 0.0
        %v820 = vand.u32 %v324, 4294901760
        %821 = vmatpush1.msra.mxu0 %v820
        %822 = vmatprep.subr.mxu0 0.0
        %v823 = vand.u32 %v323, 4294901760
        %824 = vmatpush1.msra.mxu0 %v823
        %825 = vmatprep.subr.mxu0 0.0
        %826 = vmatpush2.msra.mxu0 0.0
        %827 = vmatprep.subr.mxu0 0.0
        %828 = vmatpush2.msra.mxu0 0.0
        %829 = vmatprep.subr.mxu0 0.0
        %830 = vmatpush2.msra.mxu0 0.0
        %831 = vmatprep.subr.mxu0 0.0
        %832 = vmatpush2.msra.mxu0 0.0
        %833 = vmatprep.subr.mxu0 0.0
        %834 = vmatpush2.msra.mxu0 0.0
        %835 = vmatprep.subr.mxu0 0.0
        %836 = vmatpush2.msra.mxu0 0.0
        %837 = vmatprep.subr.mxu0 0.0
        %838 = vmatpush2.msra.mxu0 0.0
        %839 = vmatprep.subr.mxu0 0.0
        %840 = vmatpush2.msra.mxu0 0.0
        %841 = vmatprep.subr.mxu0 0.0
        %842 = vmatpush2.msra.mxu0 0.0
        %843 = vmatprep.subr.mxu0 0.0
        %844 = vmatpush2.msra.mxu0 0.0
        %845 = vmatprep.subr.mxu0 0.0
        %846 = vmatpush2.msra.mxu0 0.0
        %847 = vmatprep.subr.mxu0 0.0
        %848 = vmatpush2.msra.mxu0 0.0
        %849 = vmatprep.subr.mxu0 0.0
        %850 = vmatpush2.msra.mxu0 0.0
        %851 = vmatprep.subr.mxu0 0.0
        %852 = vmatpush2.msra.mxu0 0.0
        %853 = vmatprep.subr.mxu0 0.0
        %854 = vmatpush2.msra.mxu0 0.0
        %855 = vmatprep.subr.mxu0 0.0
        %856 = vmatpush2.msra.mxu0 0.0
        %857 = vmatprep.mubr.f32.mxu0 0.0
        %v858 = vand.u32 %v789, 4294901760
        %v859 = vsub.f32 %v789, %v858
        %v860 = vand.u32 %v859, 4294901760
        %v861 = vsub.f32 %v859, %v860
        %v862 = vand.u32 %v861, 4294901760
        %863 = vmatmul.mubr.f32.gmra.mxu0 %v862
        %v864 = vpop.f32.mrf.mxu0
        %v865 = vadd.f32 0.0, %v864
        %v866 = vpop.f32.mrf.mxu0
        %867 = vdwg.mxu0
        %868 = vmatprep.subr.mxu0 0.0
        %869 = vmatpush1.msra.mxu0 0.0
        %870 = vmatprep.subr.mxu0 0.0
        %871 = vmatpush1.msra.mxu0 0.0
        %872 = vmatprep.subr.mxu0 0.0
        %873 = vmatpush1.msra.mxu0 0.0
        %874 = vmatprep.subr.mxu0 0.0
        %875 = vmatpush1.msra.mxu0 0.0
        %876 = vmatprep.subr.mxu0 0.0
        %877 = vmatpush1.msra.mxu0 0.0
        %878 = vmatprep.subr.mxu0 0.0
        %879 = vmatpush1.msra.mxu0 0.0
        %880 = vmatprep.subr.mxu0 0.0
        %881 = vmatpush1.msra.mxu0 0.0
        %882 = vmatprep.subr.mxu0 0.0
        %883 = vmatpush1.msra.mxu0 0.0
        %884 = vmatprep.subr.mxu0 0.0
        %885 = vmatpush1.msra.mxu0 0.0
        %886 = vmatprep.subr.mxu0 0.0
        %887 = vmatpush1.msra.mxu0 0.0
        %888 = vmatprep.subr.mxu0 0.0
        %889 = vmatpush1.msra.mxu0 0.0
        %890 = vmatprep.subr.mxu0 0.0
        %891 = vmatpush1.msra.mxu0 0.0
        %892 = vmatprep.subr.mxu0 0.0
        %893 = vmatpush1.msra.mxu0 0.0
        %894 = vmatprep.subr.mxu0 0.0
        %895 = vmatpush1.msra.mxu0 0.0
        %896 = vmatprep.subr.mxu0 0.0
        %v897 = vand.u32 %v324, 4294901760
        %v898 = vsub.f32 %v324, %v897
        %v899 = vand.u32 %v898, 4294901760
        %v900 = vsub.f32 %v898, %v899
        %v901 = vand.u32 %v900, 4294901760
        %902 = vmatpush1.msra.mxu0 %v901
        %903 = vmatprep.subr.mxu0 0.0
        %v904 = vand.u32 %v323, 4294901760
        %v905 = vsub.f32 %v323, %v904
        %v906 = vand.u32 %v905, 4294901760
        %v907 = vsub.f32 %v905, %v906
        %v908 = vand.u32 %v907, 4294901760
        %909 = vmatpush1.msra.mxu0 %v908
        %910 = vmatprep.subr.mxu0 0.0
        %911 = vmatpush2.msra.mxu0 0.0
        %912 = vmatprep.subr.mxu0 0.0
        %913 = vmatpush2.msra.mxu0 0.0
        %914 = vmatprep.subr.mxu0 0.0
        %915 = vmatpush2.msra.mxu0 0.0
        %916 = vmatprep.subr.mxu0 0.0
        %917 = vmatpush2.msra.mxu0 0.0
        %918 = vmatprep.subr.mxu0 0.0
        %919 = vmatpush2.msra.mxu0 0.0
        %920 = vmatprep.subr.mxu0 0.0
        %921 = vmatpush2.msra.mxu0 0.0
        %922 = vmatprep.subr.mxu0 0.0
        %923 = vmatpush2.msra.mxu0 0.0
        %924 = vmatprep.subr.mxu0 0.0
        %925 = vmatpush2.msra.mxu0 0.0
        %926 = vmatprep.subr.mxu0 0.0
        %927 = vmatpush2.msra.mxu0 0.0
        %928 = vmatprep.subr.mxu0 0.0
        %929 = vmatpush2.msra.mxu0 0.0
        %930 = vmatprep.subr.mxu0 0.0
        %931 = vmatpush2.msra.mxu0 0.0
        %932 = vmatprep.subr.mxu0 0.0
        %933 = vmatpush2.msra.mxu0 0.0
        %934 = vmatprep.subr.mxu0 0.0
        %935 = vmatpush2.msra.mxu0 0.0
        %936 = vmatprep.subr.mxu0 0.0
        %937 = vmatpush2.msra.mxu0 0.0
        %938 = vmatprep.subr.mxu0 0.0
        %939 = vmatpush2.msra.mxu0 0.0
        %940 = vmatprep.subr.mxu0 0.0
        %941 = vmatpush2.msra.mxu0 0.0
        %942 = vmatprep.mubr.f32.mxu0 0.0
        %v943 = vand.u32 %v789, 4294901760
        %944 = vmatmul.mubr.f32.gmra.mxu0 %v943
        %v945 = vpop.f32.mrf.mxu0
        %v946 = vadd.f32 %v865, %v945
        %v947 = vpop.f32.mrf.mxu0
        %948 = vdwg.mxu0
        %949 = vmatprep.subr.mxu0 0.0
        %950 = vmatpush1.msra.mxu0 0.0
        %951 = vmatprep.subr.mxu0 0.0
        %952 = vmatpush1.msra.mxu0 0.0
        %953 = vmatprep.subr.mxu0 0.0
        %954 = vmatpush1.msra.mxu0 0.0
        %955 = vmatprep.subr.mxu0 0.0
        %956 = vmatpush1.msra.mxu0 0.0
        %957 = vmatprep.subr.mxu0 0.0
        %958 = vmatpush1.msra.mxu0 0.0
        %959 = vmatprep.subr.mxu0 0.0
        %960 = vmatpush1.msra.mxu0 0.0
        %961 = vmatprep.subr.mxu0 0.0
        %962 = vmatpush1.msra.mxu0 0.0
        %963 = vmatprep.subr.mxu0 0.0
        %964 = vmatpush1.msra.mxu0 0.0
        %965 = vmatprep.subr.mxu0 0.0
        %966 = vmatpush1.msra.mxu0 0.0
        %967 = vmatprep.subr.mxu0 0.0
        %968 = vmatpush1.msra.mxu0 0.0
        %969 = vmatprep.subr.mxu0 0.0
        %970 = vmatpush1.msra.mxu0 0.0
        %971 = vmatprep.subr.mxu0 0.0
        %972 = vmatpush1.msra.mxu0 0.0
        %973 = vmatprep.subr.mxu0 0.0
        %974 = vmatpush1.msra.mxu0 0.0
        %975 = vmatprep.subr.mxu0 0.0
        %976 = vmatpush1.msra.mxu0 0.0
        %977 = vmatprep.subr.mxu0 0.0
        %v978 = vand.u32 %v324, 4294901760
        %v979 = vsub.f32 %v324, %v978
        %980 = vmatpush1.msra.mxu0 %v979
        %981 = vmatprep.subr.mxu0 0.0
        %v982 = vand.u32 %v323, 4294901760
        %v983 = vsub.f32 %v323, %v982
        %984 = vmatpush1.msra.mxu0 %v983
        %985 = vmatprep.subr.mxu0 0.0
        %986 = vmatpush2.msra.mxu0 0.0
        %987 = vmatprep.subr.mxu0 0.0
        %988 = vmatpush2.msra.mxu0 0.0
        %989 = vmatprep.subr.mxu0 0.0
        %990 = vmatpush2.msra.mxu0 0.0
        %991 = vmatprep.subr.mxu0 0.0
        %992 = vmatpush2.msra.mxu0 0.0
        %993 = vmatprep.subr.mxu0 0.0
        %994 = vmatpush2.msra.mxu0 0.0
        %995 = vmatprep.subr.mxu0 0.0
        %996 = vmatpush2.msra.mxu0 0.0
        %997 = vmatprep.subr.mxu0 0.0
        %998 = vmatpush2.msra.mxu0 0.0
        %999 = vmatprep.subr.mxu0 0.0
        %1000 = vmatpush2.msra.mxu0 0.0
        %1001 = vmatprep.subr.mxu0 0.0
        %1002 = vmatpush2.msra.mxu0 0.0
        %1003 = vmatprep.subr.mxu0 0.0
        %1004 = vmatpush2.msra.mxu0 0.0
        %1005 = vmatprep.subr.mxu0 0.0
        %1006 = vmatpush2.msra.mxu0 0.0
        %1007 = vmatprep.subr.mxu0 0.0
        %1008 = vmatpush2.msra.mxu0 0.0
        %1009 = vmatprep.subr.mxu0 0.0
        %1010 = vmatpush2.msra.mxu0 0.0
        %1011 = vmatprep.subr.mxu0 0.0
        %1012 = vmatpush2.msra.mxu0 0.0
        %1013 = vmatprep.subr.mxu0 0.0
        %1014 = vmatpush2.msra.mxu0 0.0
        %1015 = vmatprep.subr.mxu0 0.0
        %1016 = vmatpush2.msra.mxu0 0.0
        %1017 = vmatprep.mubr.f32.mxu0 0.0
        %v1018 = vand.u32 %v789, 4294901760
        %v1019 = vsub.f32 %v789, %v1018
        %1020 = vmatmul.mubr.f32.gmra.mxu0 %v1019
        %v1021 = vpop.f32.mrf.mxu0
        %v1022 = vadd.f32 %v946, %v1021
        %v1023 = vpop.f32.mrf.mxu0
        %1024 = vdwg.mxu0
        %1025 = vmatprep.subr.mxu0 0.0
        %1026 = vmatpush1.msra.mxu0 0.0
        %1027 = vmatprep.subr.mxu0 0.0
        %1028 = vmatpush1.msra.mxu0 0.0
        %1029 = vmatprep.subr.mxu0 0.0
        %1030 = vmatpush1.msra.mxu0 0.0
        %1031 = vmatprep.subr.mxu0 0.0
        %1032 = vmatpush1.msra.mxu0 0.0
        %1033 = vmatprep.subr.mxu0 0.0
        %1034 = vmatpush1.msra.mxu0 0.0
        %1035 = vmatprep.subr.mxu0 0.0
        %1036 = vmatpush1.msra.mxu0 0.0
        %1037 = vmatprep.subr.mxu0 0.0
        %1038 = vmatpush1.msra.mxu0 0.0
        %1039 = vmatprep.subr.mxu0 0.0
        %1040 = vmatpush1.msra.mxu0 0.0
        %1041 = vmatprep.subr.mxu0 0.0
        %1042 = vmatpush1.msra.mxu0 0.0
        %1043 = vmatprep.subr.mxu0 0.0
        %1044 = vmatpush1.msra.mxu0 0.0
        %1045 = vmatprep.subr.mxu0 0.0
        %1046 = vmatpush1.msra.mxu0 0.0
        %1047 = vmatprep.subr.mxu0 0.0
        %1048 = vmatpush1.msra.mxu0 0.0
        %1049 = vmatprep.subr.mxu0 0.0
        %1050 = vmatpush1.msra.mxu0 0.0
        %1051 = vmatprep.subr.mxu0 0.0
        %1052 = vmatpush1.msra.mxu0 0.0
        %1053 = vmatprep.subr.mxu0 0.0
        %v1054 = vand.u32 %v324, 4294901760
        %1055 = vmatpush1.msra.mxu0 %v1054
        %1056 = vmatprep.subr.mxu0 0.0
        %v1057 = vand.u32 %v323, 4294901760
        %1058 = vmatpush1.msra.mxu0 %v1057
        %1059 = vmatprep.subr.mxu0 0.0
        %1060 = vmatpush2.msra.mxu0 0.0
        %1061 = vmatprep.subr.mxu0 0.0
        %1062 = vmatpush2.msra.mxu0 0.0
        %1063 = vmatprep.subr.mxu0 0.0
        %1064 = vmatpush2.msra.mxu0 0.0
        %1065 = vmatprep.subr.mxu0 0.0
        %1066 = vmatpush2.msra.mxu0 0.0
        %1067 = vmatprep.subr.mxu0 0.0
        %1068 = vmatpush2.msra.mxu0 0.0
        %1069 = vmatprep.subr.mxu0 0.0
        %1070 = vmatpush2.msra.mxu0 0.0
        %1071 = vmatprep.subr.mxu0 0.0
        %1072 = vmatpush2.msra.mxu0 0.0
        %1073 = vmatprep.subr.mxu0 0.0
        %1074 = vmatpush2.msra.mxu0 0.0
        %1075 = vmatprep.subr.mxu0 0.0
        %1076 = vmatpush2.msra.mxu0 0.0
        %1077 = vmatprep.subr.mxu0 0.0
        %1078 = vmatpush2.msra.mxu0 0.0
        %1079 = vmatprep.subr.mxu0 0.0
        %1080 = vmatpush2.msra.mxu0 0.0
        %1081 = vmatprep.subr.mxu0 0.0
        %1082 = vmatpush2.msra.mxu0 0.0
        %1083 = vmatprep.subr.mxu0 0.0
        %1084 = vmatpush2.msra.mxu0 0.0
        %1085 = vmatprep.subr.mxu0 0.0
        %1086 = vmatpush2.msra.mxu0 0.0
        %1087 = vmatprep.subr.mxu0 0.0
        %1088 = vmatpush2.msra.mxu0 0.0
        %1089 = vmatprep.subr.mxu0 0.0
        %1090 = vmatpush2.msra.mxu0 0.0
        %1091 = vmatprep.mubr.f32.mxu0 0.0
        %v1092 = vand.u32 %v789, 4294901760
        %v1093 = vsub.f32 %v789, %v1092
        %v1094 = vand.u32 %v1093, 4294901760
        %1095 = vmatmul.mubr.f32.gmra.mxu0 %v1094
        %v1096 = vpop.f32.mrf.mxu0
        %v1097 = vadd.f32 %v1022, %v1096
        %v1098 = vpop.f32.mrf.mxu0
        %1099 = vdwg.mxu0
        %1100 = vmatprep.subr.mxu0 0.0
        %1101 = vmatpush1.msra.mxu0 0.0
        %1102 = vmatprep.subr.mxu0 0.0
        %1103 = vmatpush1.msra.mxu0 0.0
        %1104 = vmatprep.subr.mxu0 0.0
        %1105 = vmatpush1.msra.mxu0 0.0
        %1106 = vmatprep.subr.mxu0 0.0
        %1107 = vmatpush1.msra.mxu0 0.0
        %1108 = vmatprep.subr.mxu0 0.0
        %1109 = vmatpush1.msra.mxu0 0.0
        %1110 = vmatprep.subr.mxu0 0.0
        %1111 = vmatpush1.msra.mxu0 0.0
        %1112 = vmatprep.subr.mxu0 0.0
        %1113 = vmatpush1.msra.mxu0 0.0
        %1114 = vmatprep.subr.mxu0 0.0
        %1115 = vmatpush1.msra.mxu0 0.0
        %1116 = vmatprep.subr.mxu0 0.0
        %1117 = vmatpush1.msra.mxu0 0.0
        %1118 = vmatprep.subr.mxu0 0.0
        %1119 = vmatpush1.msra.mxu0 0.0
        %1120 = vmatprep.subr.mxu0 0.0
        %1121 = vmatpush1.msra.mxu0 0.0
        %1122 = vmatprep.subr.mxu0 0.0
        %1123 = vmatpush1.msra.mxu0 0.0
        %1124 = vmatprep.subr.mxu0 0.0
        %1125 = vmatpush1.msra.mxu0 0.0
        %1126 = vmatprep.subr.mxu0 0.0
        %1127 = vmatpush1.msra.mxu0 0.0
        %1128 = vmatprep.subr.mxu0 0.0
        %v1129 = vand.u32 %v324, 4294901760
        %v1130 = vsub.f32 %v324, %v1129
        %v1131 = vand.u32 %v1130, 4294901760
        %1132 = vmatpush1.msra.mxu0 %v1131
        %1133 = vmatprep.subr.mxu0 0.0
        %v1134 = vand.u32 %v323, 4294901760
        %v1135 = vsub.f32 %v323, %v1134
        %v1136 = vand.u32 %v1135, 4294901760
        %1137 = vmatpush1.msra.mxu0 %v1136
        %1138 = vmatprep.subr.mxu0 0.0
        %1139 = vmatpush2.msra.mxu0 0.0
        %1140 = vmatprep.subr.mxu0 0.0
        %1141 = vmatpush2.msra.mxu0 0.0
        %1142 = vmatprep.subr.mxu0 0.0
        %1143 = vmatpush2.msra.mxu0 0.0
        %1144 = vmatprep.subr.mxu0 0.0
        %1145 = vmatpush2.msra.mxu0 0.0
        %1146 = vmatprep.subr.mxu0 0.0
        %1147 = vmatpush2.msra.mxu0 0.0
        %1148 = vmatprep.subr.mxu0 0.0
        %1149 = vmatpush2.msra.mxu0 0.0
        %1150 = vmatprep.subr.mxu0 0.0
        %1151 = vmatpush2.msra.mxu0 0.0
        %1152 = vmatprep.subr.mxu0 0.0
        %1153 = vmatpush2.msra.mxu0 0.0
        %1154 = vmatprep.subr.mxu0 0.0
        %1155 = vmatpush2.msra.mxu0 0.0
        %1156 = vmatprep.subr.mxu0 0.0
        %1157 = vmatpush2.msra.mxu0 0.0
        %1158 = vmatprep.subr.mxu0 0.0
        %1159 = vmatpush2.msra.mxu0 0.0
        %1160 = vmatprep.subr.mxu0 0.0
        %1161 = vmatpush2.msra.mxu0 0.0
        %1162 = vmatprep.subr.mxu0 0.0
        %1163 = vmatpush2.msra.mxu0 0.0
        %1164 = vmatprep.subr.mxu0 0.0
        %1165 = vmatpush2.msra.mxu0 0.0
        %1166 = vmatprep.subr.mxu0 0.0
        %1167 = vmatpush2.msra.mxu0 0.0
        %1168 = vmatprep.subr.mxu0 0.0
        %1169 = vmatpush2.msra.mxu0 0.0
        %1170 = vmatprep.mubr.f32.mxu0 0.0
        %v1171 = vand.u32 %v789, 4294901760
        %1172 = vmatmul.mubr.f32.gmra.mxu0 %v1171
        %v1173 = vpop.f32.mrf.mxu0
        %v1174 = vadd.f32 %v1097, %v1173
        %v1175 = vpop.f32.mrf.mxu0
        %1176 = vdwg.mxu0
        %1177 = vmatprep.subr.mxu0 0.0
        %1178 = vmatpush1.msra.mxu0 0.0
        %1179 = vmatprep.subr.mxu0 0.0
        %1180 = vmatpush1.msra.mxu0 0.0
        %1181 = vmatprep.subr.mxu0 0.0
        %1182 = vmatpush1.msra.mxu0 0.0
        %1183 = vmatprep.subr.mxu0 0.0
        %1184 = vmatpush1.msra.mxu0 0.0
        %1185 = vmatprep.subr.mxu0 0.0
        %1186 = vmatpush1.msra.mxu0 0.0
        %1187 = vmatprep.subr.mxu0 0.0
        %1188 = vmatpush1.msra.mxu0 0.0
        %1189 = vmatprep.subr.mxu0 0.0
        %1190 = vmatpush1.msra.mxu0 0.0
        %1191 = vmatprep.subr.mxu0 0.0
        %1192 = vmatpush1.msra.mxu0 0.0
        %1193 = vmatprep.subr.mxu0 0.0
        %1194 = vmatpush1.msra.mxu0 0.0
        %1195 = vmatprep.subr.mxu0 0.0
        %1196 = vmatpush1.msra.mxu0 0.0
        %1197 = vmatprep.subr.mxu0 0.0
        %1198 = vmatpush1.msra.mxu0 0.0
        %1199 = vmatprep.subr.mxu0 0.0
        %1200 = vmatpush1.msra.mxu0 0.0
        %1201 = vmatprep.subr.mxu0 0.0
        %1202 = vmatpush1.msra.mxu0 0.0
        %1203 = vmatprep.subr.mxu0 0.0
        %1204 = vmatpush1.msra.mxu0 0.0
        %1205 = vmatprep.subr.mxu0 0.0
        %v1206 = vand.u32 %v324, 4294901760
        %1207 = vmatpush1.msra.mxu0 %v1206
        %1208 = vmatprep.subr.mxu0 0.0
        %v1209 = vand.u32 %v323, 4294901760
        %1210 = vmatpush1.msra.mxu0 %v1209
        %1211 = vmatprep.subr.mxu0 0.0
        %1212 = vmatpush2.msra.mxu0 0.0
        %1213 = vmatprep.subr.mxu0 0.0
        %1214 = vmatpush2.msra.mxu0 0.0
        %1215 = vmatprep.subr.mxu0 0.0
        %1216 = vmatpush2.msra.mxu0 0.0
        %1217 = vmatprep.subr.mxu0 0.0
        %1218 = vmatpush2.msra.mxu0 0.0
        %1219 = vmatprep.subr.mxu0 0.0
        %1220 = vmatpush2.msra.mxu0 0.0
        %1221 = vmatprep.subr.mxu0 0.0
        %1222 = vmatpush2.msra.mxu0 0.0
        %1223 = vmatprep.subr.mxu0 0.0
        %1224 = vmatpush2.msra.mxu0 0.0
        %1225 = vmatprep.subr.mxu0 0.0
        %1226 = vmatpush2.msra.mxu0 0.0
        %1227 = vmatprep.subr.mxu0 0.0
        %1228 = vmatpush2.msra.mxu0 0.0
        %1229 = vmatprep.subr.mxu0 0.0
        %1230 = vmatpush2.msra.mxu0 0.0
        %1231 = vmatprep.subr.mxu0 0.0
        %1232 = vmatpush2.msra.mxu0 0.0
        %1233 = vmatprep.subr.mxu0 0.0
        %1234 = vmatpush2.msra.mxu0 0.0
        %1235 = vmatprep.subr.mxu0 0.0
        %1236 = vmatpush2.msra.mxu0 0.0
        %1237 = vmatprep.subr.mxu0 0.0
        %1238 = vmatpush2.msra.mxu0 0.0
        %1239 = vmatprep.subr.mxu0 0.0
        %1240 = vmatpush2.msra.mxu0 0.0
        %1241 = vmatprep.subr.mxu0 0.0
        %1242 = vmatpush2.msra.mxu0 0.0
        %1243 = vmatprep.mubr.f32.mxu0 0.0
        %v1244 = vand.u32 %v789, 4294901760
        %1245 = vmatmul.mubr.f32.gmra.mxu0 %v1244
        %v1246 = vpop.f32.mrf.mxu0
        %v1247 = vadd.f32 %v1174, %v1246
        %v1248 = vpop.f32.mrf.mxu0
        %1249 = vdwg.mxu0
        %vm1250 = vcmask 44032
        %1251 = vst.msk [vmem:[#allocation2 + $0x8] sm:$0xf] %vm1250, %v1247
        // Predicated region
        $region49: #{tpu_custom_call.1} parent=35 // pred_check
          %p1252 = pneg %p278
        $region50: #{tpu_custom_call.1} parent=35 // pred_check_branch
          %1254 = sbr.rel (%p1252) target = $region52
        $region51: #{tpu_custom_call.1} parent=35 // pred_region
          %v1255 = vld [vmem:[#allocation2 + $0x9] sm:$0x3]
          %v1256 = vmul.f32 %v1255, 2.0
          %1258 = vrot.lane.b32.xlu0 %v1255, 1
          %v1259 = vpop.permute.xlu0 %1258
          %v1261 = vsub.f32 %v1256, %v1259
          %1262 = vrot.lane.b32.xlu0 %v1255, 2
          %v1263 = vpop.permute.xlu0 %1262
          %v1265 = vsub.f32 %v1261, %v1263
          %1266 = vrot.lane.b32.xlu0 %v1255, 127
          %v1267 = vpop.permute.xlu0 %1266
          %v1269 = vsub.f32 %v1256, %v1267
          %1270 = vrot.lane.b32.xlu0 %v1255, 126
          %v1271 = vpop.permute.xlu0 %1270
          %v1273 = vsub.f32 %v1269, %v1271
          %v1274 = vld [vmem:[#allocation2 + $0x8] sm:$0x3]
          %v1275 = vsub.f32 %v1256, %v1274
          %v1276 = vld [vmem:[#allocation2 + $0x7] sm:$0x3]
          %v1277 = vsub.f32 %v1275, %v1276
          %v1278 = vld [vmem:[#allocation2 + $0xa] sm:$0x3]
          %v1279 = vsub.f32 %v1256, %v1278
          %v1280 = vld [vmem:[#allocation2 + $0xb] sm:$0x3]
          %v1281 = vsub.f32 %v1279, %v1280
          %v1282 = vmul.f32 %v1265, %v1265
          %v1283 = vmul.f32 %v1273, %v1273
          %v1284 = vadd.f32 %v1282, %v1283
          %v1285 = vmul.f32 %v1277, %v1277
          %v1286 = vadd.f32 %v1284, %v1285
          %v1287 = vmul.f32 %v1281, %v1281
          %v1288 = vadd.f32 %v1286, %v1287
          %v1289 = vmul.f32 %v1288, 0.00024414063
          %1291 = vrot.lane.b32.xlu0 %v1289, 126
          %v1292 = vpop.permute.xlu0 %1291
          %vm1294 = vcmask 9216
          %1295 = vst.msk [vmem:[%s275] sm:$0x3] %vm1294, %v1292
        $region52: #{tpu_custom_call.1} parent=35 // pred_fallthru
          _
        %s1296 = sand.u32 %s142, 1
        %s1297 = scalar_lea.sflag [#allocation5], %s1296
        %s1298 = sand.u32 %s142, 1
        %s1299 = smul.addr %s1298, 2
        %s1300 = scalar_lea.vmem [#allocation8], %s1299
        // Predicated region
        $region53: #{tpu_custom_call.1} parent=35 // pred_check
          %p1301 = pneg %p152
        $region54: #{tpu_custom_call.1} parent=35 // pred_check_branch
          %1303 = sbr.rel (%p1301) target = $region56
        $region55: #{tpu_custom_call.1} parent=35 // pred_region
          %s1305 = ssub.s32 32, 32
          %1306 = vsyncadd %s1297, %s1305
          %s1307 = smul.addr %s28, 32
          %s1308 = scalar_lea.hbm %s4, %s1307
          %s1310 = sshll.u32 %s1300, 4
          %s1311 = int_to_ptr.vmem [resolvable:$true] %s1310
          %1313 = dma.vmem_to_hbm [thread:$0]  %s1311, 32, %s1308, %s1297
        $region56: #{tpu_custom_call.1} parent=35 // pred_fallthru
          _
      $region36: #{tpu_custom_call.1} parent=5 // pred_fallthru
        _
      %p1314 = scmp.le.s32.totalorder 2, %s19
      // Predicated region
      $region57: #{tpu_custom_call.1} parent=5 // pred_check
        %p1315 = pneg %p1314
      $region58: #{tpu_custom_call.1} parent=5 // pred_check_branch
        %1317 = sbr.rel (%p1315) target = $region60
      $region59: #{tpu_custom_call.1} parent=5 // pred_region
        %s1318 = ssub.s32 %s19, 2
        // Predicated region
        $region61: #{tpu_custom_call.1} parent=59 // pred_check
          %p1319 = pneg %p158
        $region62: #{tpu_custom_call.1} parent=59 // pred_check_branch
          %1321 = sbr.rel (%p1319) target = $region64
        $region63: #{tpu_custom_call.1} parent=59 // pred_region
          %s1322 = sand.u32 %s143, 1
          %s1323 = scalar_lea.sflag [#allocation5], %s1322
          %s1324 = sand.u32 %s143, 1
          %s1325 = smul.addr %s1324, 2
          %s1326 = scalar_lea.vmem [#allocation8], %s1325
          %1327 = dma.done %s1323, 32
        $region64: #{tpu_custom_call.1} parent=59 // pred_fallthru
          _
      $region60: #{tpu_custom_call.1} parent=5 // pred_fallthru
        _
    $region6: #{tpu_custom_call.1} parent=1 // loop_footer
      %s23 = sadd.s32 1, %s19
    $region7: #{tpu_custom_call.1} parent=1 // loop_footer_branch
      %18 = sbr.rel target = $region3
    $region8: #{tpu_custom_call.1} parent=1 // loop_exit
      _
    %1328 = vsyncpa [#allocation4], 1
    %s1329 = scalar_lea.sflag [#allocation4], 1
    %1330 = vsyncpa %s1329, 1
    %1331 = vsyncpa [#allocation7], 1
    %s1332 = scalar_lea.sflag [#allocation7], 1
    %1333 = vsyncpa %s1332, 1
    %1334 = vsyncpa [#allocation5], 1
    %s1335 = scalar_lea.sflag [#allocation5], 1
    %1336 = vsyncpa %s1335, 1

</llo_original>
